<compile_context>
chip_gen: v7x
topology: tpu7x:2x2x1
jax: 0.10.0
libtpu: 0.0.40
codegen_flags: <defaults>
</compile_context>

<pallas_src>
import functools

import jax
import jax.numpy as jnp
from jax.experimental import pallas as pl
from jax.experimental.pallas import tpu as pltpu


def _round_up(x, m):
    return ((x + m - 1) // m) * m


def _pick_row_tiling(n, max_tile=256):
    """Choose (tm, n_padded) with n_padded % tm == 0 and tm % 8 == 0.

    Minimizes padding first, then prefers >=2 row tiles (so the "parallel"
    grid axis can be sharded across v7x's two TensorCores), then larger tiles.
    """
    n8 = _round_up(max(n, 8), 8)
    best_key, best_t, best_np = None, n8, n8
    for t in range(8, min(max_tile, n8) + 1, 8):
        n_pad = _round_up(n8, t)
        tiles = n_pad // t
        key = (n_pad - n8, 0 if tiles >= 2 else 1, -t)
        if best_key is None or key < best_key:
            best_key, best_t, best_np = key, t, n_pad
    return best_t, best_np


def _stage1_kernel(winv_ref, feat_ref, w_ref, d_ref, t_ref):
    """t_i = d_i * (Winv_i @ (features @ W)) for one row tile i."""
    # fw recomputed per row tile: tiny matmul, keeps grid points independent
    # (no scratch carried across a "parallel" axis -> correct under megacore).
    fw = jnp.dot(feat_ref[...], w_ref[...], preferred_element_type=jnp.float32)
    fw = fw.astype(winv_ref.dtype)
    acc = jnp.dot(winv_ref[...], fw, preferred_element_type=jnp.float32)
    t_ref[...] = (d_ref[...] * acc).astype(t_ref.dtype)


def _stage2_kernel(wav_ref, t_ref, o_ref):
    """out_i = wavelets_i @ t for one row tile i."""
    o_ref[...] = jnp.dot(wav_ref[...], t_ref[...],
                         preferred_element_type=jnp.float32).astype(o_ref.dtype)


def hwnn_layer_forward(wavelets, wavelets_inv, diag_filter, features,
                       weight_matrix, *, mxu_dtype=jnp.bfloat16,
                       row_tile_cap=256):
    """out = wavelets @ diag(d) @ wavelets_inv @ features @ weight_matrix."""
    N = wavelets.shape[0]
    Din, Dout = weight_matrix.shape
    assert wavelets.shape == (N, N) and wavelets_inv.shape == (N, N)
    assert features.shape == (N, Din) and diag_filter.shape == (N,)

    tm, Np = _pick_row_tiling(N, row_tile_cap)
    Dinp = _round_up(Din, 128)
    Doutp = _round_up(Dout, 128)

    compute_dtype = jnp.float32 if mxu_dtype is None else mxu_dtype

    # Pad once; zero padding is benign for every matmul in the chain and all
    # intermediates stay lane-dense at the padded widths.
    wav_p = jnp.pad(wavelets, ((0, Np - N), (0, Np - N))).astype(compute_dtype)
    winv_p = jnp.pad(wavelets_inv,
                     ((0, Np - N), (0, Np - N))).astype(compute_dtype)
    feat_p = jnp.pad(features,
                     ((0, Np - N), (0, Dinp - Din))).astype(compute_dtype)
    w_p = jnp.pad(weight_matrix,
                  ((0, Dinp - Din), (0, Doutp - Dout))).astype(compute_dtype)
    d_p = jnp.pad(diag_filter.astype(jnp.float32), (0, Np - N)).reshape(Np, 1)

    grid = (Np // tm,)
    compiler_params = pltpu.CompilerParams(dimension_semantics=("parallel",))

    # Row tile of an (Np, Np) operand; full-extent blocks for the small
    # operands (their block index never changes, so they are DMA'd once).
    row_spec_nn = pl.BlockSpec((tm, Np), lambda i: (i, 0))
    full_feat = pl.BlockSpec((Np, Dinp), lambda i: (0, 0))
    full_w = pl.BlockSpec((Dinp, Doutp), lambda i: (0, 0))
    d_spec = pl.BlockSpec((tm, 1), lambda i: (i, 0))
    out_row = pl.BlockSpec((tm, Doutp), lambda i: (i, 0))
    full_t = pl.BlockSpec((Np, Doutp), lambda i: (0, 0))

    # Stage 1: t = diag(d) @ wavelets_inv @ (features @ W)   -> (Np, Doutp)
    t_p = pl.pallas_call(
        _stage1_kernel,
        out_shape=jax.ShapeDtypeStruct((Np, Doutp), compute_dtype),
        grid_spec=pltpu.PrefetchScalarGridSpec(
            num_scalar_prefetch=0,
            grid=grid,
            in_specs=[row_spec_nn, full_feat, full_w, d_spec],
            out_specs=out_row),
        compiler_params=compiler_params,
    )(winv_p, feat_p, w_p, d_p)

    # Stage 2: out = wavelets @ t                             -> (Np, Doutp)
    out_p = pl.pallas_call(
        _stage2_kernel,
        out_shape=jax.ShapeDtypeStruct((Np, Doutp), jnp.float32),
        grid_spec=pltpu.PrefetchScalarGridSpec(
            num_scalar_prefetch=0,
            grid=grid,
            in_specs=[row_spec_nn, full_t],
            out_specs=out_row),
        compiler_params=compiler_params,
    )(wav_p, t_p)

    # Single slice of the final result only.
    return out_p[:N, :Dout]


def xavier_uniform(key, fan_in, fan_out):
    limit = (6.0 / (fan_in + fan_out)) ** 0.5
    return jax.random.uniform(key, (fan_in, fan_out), jnp.float32, -limit, limit)


if __name__ == "__main__":
    # Small problem sized so row tiling (384 -> 2 tiles of 192) and the
    # Din/Dout padding to 128 lanes are actually exercised.
    num_stock = 384
    input_size = 96
    output_size = 48
    K1, K2 = 2, 2

    key = jax.random.PRNGKey(0)
    k_w, k_d, k_p, k_f, k_wav = jax.random.split(key, 5)

    # Parameter init mirroring HWNNLayer.init_parameters()
    weight_matrix = xavier_uniform(k_w, input_size, output_size)
    diagonal_weight_filter = jax.random.uniform(
        k_d, (num_stock,), jnp.float32, 0.99, 1.01)
    par = jax.random.uniform(k_p, (K1 + K2,), jnp.float32, 0.0, 0.99)  # unused (approx=False)

    # Synthetic hypergraph snapshot data (wavelets and their inverse).
    features = jax.random.normal(k_f, (num_stock, input_size), jnp.float32)
    base = jax.random.normal(k_wav, (num_stock, num_stock), jnp.float32) * 0.01
    wavelets = jnp.eye(num_stock, dtype=jnp.float32) + base
    wavelets_inv = jnp.linalg.inv(wavelets)

    # Plain-JAX reference of the original left-to-right module math.
    ref = (wavelets @ jnp.diag(diagonal_weight_filter) @ wavelets_inv
           @ features @ weight_matrix)

    # Default path: bf16 MXU inputs, f32 accumulation.
    fwd_bf16 = jax.jit(hwnn_layer_forward)
    out_bf16 = jax.block_until_ready(
        fwd_bf16(wavelets, wavelets_inv, diagonal_weight_filter,
                 features, weight_matrix))
    assert out_bf16.shape == (num_stock, output_size)
    assert jnp.allclose(out_bf16, ref, atol=5e-2, rtol=5e-2), \
        "bf16-MXU path mismatch vs reference"

    # Strict f32 path (exact module semantics up to f32 rounding).
    fwd_f32 = jax.jit(functools.partial(hwnn_layer_forward, mxu_dtype=None))
    out_f32 = jax.block_until_ready(
        fwd_f32(wavelets, wavelets_inv, diagonal_weight_filter,
                features, weight_matrix))
    assert jnp.allclose(out_f32, ref, atol=2e-3, rtol=2e-3), \
        "f32 path mismatch vs reference"

    # TODO(synk): approx=True Chebyshev-style polynomial branch not implemented
    # (default module config is approx=False).
    print("KERNEL_OK")
</pallas_src>

<mosaic_0001>
module attributes {stable_mosaic.version = 11 : i64} {
  func.func @_stage1_kernel(%arg0: i32, %arg1: memref<192x384xbf16, #tpu.memory_space<vmem>>, %arg2: memref<384x128xbf16, #tpu.memory_space<vmem>>, %arg3: memref<128x128xbf16, #tpu.memory_space<vmem>>, %arg4: memref<192x1xf32, #tpu.memory_space<vmem>>, %arg5: memref<192x128xbf16, #tpu.memory_space<vmem>>) attributes {dimension_semantics = [#tpu.dimension_semantics<parallel>], iteration_bounds = array<i64: 2>, scalar_prefetch = 0 : i64, scratch_operands = 0 : i64, tpu.core_type = #tpu.core_type<tc>, window_params = [{transform_indices = @transform_0, window_bounds = array<i64: 192, 384>}, {pipeline_mode = #tpu.pipeline_mode<synchronous>, transform_indices = @transform_1, window_bounds = array<i64: 384, 128>}, {pipeline_mode = #tpu.pipeline_mode<synchronous>, transform_indices = @transform_2, window_bounds = array<i64: 128, 128>}, {transform_indices = @transform_3, window_bounds = array<i64: 192, 1>}, {transform_indices = @transform_4, window_bounds = array<i64: 192, 128>}]} {
    %c0 = arith.constant 0 : index
    %c0_0 = arith.constant 0 : index
    %0 = vector.load %arg2[%c0, %c0_0] : memref<384x128xbf16, #tpu.memory_space<vmem>>, vector<384x128xbf16>
    %c0_1 = arith.constant 0 : index
    %c0_2 = arith.constant 0 : index
    %1 = vector.load %arg3[%c0_1, %c0_2] : memref<128x128xbf16, #tpu.memory_space<vmem>>, vector<128x128xbf16>
    %cst = arith.constant dense<0.000000e+00> : vector<384x128xf32>
    %2 = tpu.matmul %0, %1, %cst {dimension_numbers = #tpu.dot_dimension_numbers<[1], [0], [0], [1], [0, 0, 1, 1], [], []>} : vector<384x128xbf16>, vector<128x128xbf16>, vector<384x128xf32> -> vector<384x128xf32>
    %3 = arith.truncf %2 : vector<384x128xf32> to vector<384x128xbf16>
    %c0_3 = arith.constant 0 : index
    %c0_4 = arith.constant 0 : index
    %4 = vector.load %arg1[%c0_3, %c0_4] : memref<192x384xbf16, #tpu.memory_space<vmem>>, vector<192x384xbf16>
    %cst_5 = arith.constant dense<0.000000e+00> : vector<192x128xf32>
    %5 = tpu.matmul %4, %3, %cst_5 {dimension_numbers = #tpu.dot_dimension_numbers<[1], [0], [0], [1], [0, 0, 1, 1], [], []>} : vector<192x384xbf16>, vector<384x128xbf16>, vector<192x128xf32> -> vector<192x128xf32>
    %c0_6 = arith.constant 0 : index
    %c0_7 = arith.constant 0 : index
    %6 = vector.load %arg4[%c0_6, %c0_7] : memref<192x1xf32, #tpu.memory_space<vmem>>, vector<192x1xf32>
    %7 = vector.broadcast %6 : vector<192x1xf32> to vector<192x128xf32>
    %8 = arith.mulf %7, %5 : vector<192x128xf32>
    %9 = arith.truncf %8 : vector<192x128xf32> to vector<192x128xbf16>
    %c0_8 = arith.constant 0 : index
    %c0_9 = arith.constant 0 : index
    %10 = vector.load %arg5[%c0_8, %c0_9] : memref<192x128xbf16, #tpu.memory_space<vmem>>, vector<192x128xbf16>
    tpu.vector_store %arg5[%c0_8, %c0_9], %9 {strides = array<i32>} : memref<192x128xbf16, #tpu.memory_space<vmem>>, vector<192x128xbf16>,
    return
  }
  func.func @transform_0(%arg0: i32) -> (i32, i32) {
    %c0_i32 = arith.constant 0 : i32
    %c0_i32_0 = arith.constant 0 : i32
    return %arg0, %c0_i32 : i32, i32
  }
  func.func @transform_1(%arg0: i32) -> (i32, i32) {
    %c0_i32 = arith.constant 0 : i32
    %c0_i32_0 = arith.constant 0 : i32
    %c0_i32_1 = arith.constant 0 : i32
    return %c0_i32, %c0_i32_0 : i32, i32
  }
  func.func @transform_2(%arg0: i32) -> (i32, i32) {
    %c0_i32 = arith.constant 0 : i32
    %c0_i32_0 = arith.constant 0 : i32
    %c0_i32_1 = arith.constant 0 : i32
    return %c0_i32, %c0_i32_0 : i32, i32
  }
  func.func @transform_3(%arg0: i32) -> (i32, i32) {
    %c0_i32 = arith.constant 0 : i32
    %c0_i32_0 = arith.constant 0 : i32
    return %arg0, %c0_i32 : i32, i32
  }
  func.func @transform_4(%arg0: i32) -> (i32, i32) {
    %c0_i32 = arith.constant 0 : i32
    %c0_i32_0 = arith.constant 0 : i32
    return %arg0, %c0_i32 : i32, i32
  }
}

module attributes {stable_mosaic.version = 11 : i64} {
  func.func @_stage2_kernel(%arg0: i32, %arg1: memref<192x384xbf16, #tpu.memory_space<vmem>>, %arg2: memref<384x128xbf16, #tpu.memory_space<vmem>>, %arg3: memref<192x128xf32, #tpu.memory_space<vmem>>) attributes {dimension_semantics = [#tpu.dimension_semantics<parallel>], iteration_bounds = array<i64: 2>, scalar_prefetch = 0 : i64, scratch_operands = 0 : i64, tpu.core_type = #tpu.core_type<tc>, window_params = [{transform_indices = @transform_0, window_bounds = array<i64: 192, 384>}, {pipeline_mode = #tpu.pipeline_mode<synchronous>, transform_indices = @transform_1, window_bounds = array<i64: 384, 128>}, {transform_indices = @transform_2, window_bounds = array<i64: 192, 128>}]} {
    %c0 = arith.constant 0 : index
    %c0_0 = arith.constant 0 : index
    %0 = vector.load %arg1[%c0, %c0_0] : memref<192x384xbf16, #tpu.memory_space<vmem>>, vector<192x384xbf16>
    %c0_1 = arith.constant 0 : index
    %c0_2 = arith.constant 0 : index
    %1 = vector.load %arg2[%c0_1, %c0_2] : memref<384x128xbf16, #tpu.memory_space<vmem>>, vector<384x128xbf16>
    %cst = arith.constant dense<0.000000e+00> : vector<192x128xf32>
    %2 = tpu.matmul %0, %1, %cst {dimension_numbers = #tpu.dot_dimension_numbers<[1], [0], [0], [1], [0, 0, 1, 1], [], []>} : vector<192x384xbf16>, vector<384x128xbf16>, vector<192x128xf32> -> vector<192x128xf32>
    %c0_3 = arith.constant 0 : index
    %c0_4 = arith.constant 0 : index
    %3 = vector.load %arg3[%c0_3, %c0_4] : memref<192x128xf32, #tpu.memory_space<vmem>>, vector<192x128xf32>
    tpu.vector_store %arg3[%c0_3, %c0_4], %2 {strides = array<i32>} : memref<192x128xf32, #tpu.memory_space<vmem>>, vector<192x128xf32>,
    return
  }
  func.func @transform_0(%arg0: i32) -> (i32, i32) {
    %c0_i32 = arith.constant 0 : i32
    %c0_i32_0 = arith.constant 0 : i32
    return %arg0, %c0_i32 : i32, i32
  }
  func.func @transform_1(%arg0: i32) -> (i32, i32) {
    %c0_i32 = arith.constant 0 : i32
    %c0_i32_0 = arith.constant 0 : i32
    %c0_i32_1 = arith.constant 0 : i32
    return %c0_i32, %c0_i32_0 : i32, i32
  }
  func.func @transform_2(%arg0: i32) -> (i32, i32) {
    %c0_i32 = arith.constant 0 : i32
    %c0_i32_0 = arith.constant 0 : i32
    return %arg0, %c0_i32 : i32, i32
  }
}

</mosaic_0001>

<llo_original>
// kernel: hwnn_layer_forward.3
$region0: #{hwnn_layer_forward.3}
  #allocation0 [shape = 'u32[]', space=smem, size = 0x4, offset = 0x4, fixed_abs, tag = 'smem constant byte address 0x4 - core index']
  #allocation1 [shape = 'u32[144,128]{1,0:T(1,128)}', space=vmem, size = 0x12000, scoped, tag = 'internal scratch']
  %s0 = inlined_call_operand.vmem [shape: bf16[384,384], index: 0, kind: input, shape index: {}]
  %s1 = inlined_call_operand.vmem [shape: bf16[384,128], index: 1, kind: input, shape index: {}]
  %s2 = inlined_call_operand.vmem [shape: f32[384,128], index: 2, kind: output, shape index: {}]
  %s3 = sld [smem:[#allocation0]]
  $region41: #{hwnn_layer_forward.3} parent=0
    _
  %s5 = ssub.s32 1, %s3
  %s6 = scalar_select 0, %s5, %s3
  loop: start=0, step=1, limit=4
  $region2: #{hwnn_layer_forward.3} parent=0 // loop_pre_header
    _
  $region3: #{hwnn_layer_forward.3} parent=0 // loop_header
    %s8 = sphi 0, %s12
    %p9 = scmp.ge.s32.totalorder %s8, 4
    %s18 = sphi 0, %s20
    %s21 = sphi 0, %s18
    %s22 = sphi 0, %s21
    %s38 = sphi 0, %s22
    %s42 = sphi 0, %s42
    %s44 = sphi 0, %s42
    %s45 = sphi 0, %s44
    %s59 = sphi 0, %s45
    %s65 = sphi 0, %s67
    %s68 = sphi 0, %s65
    %s69 = sphi 0, %s68
    %s85 = sphi 0, %s69
  $region4: #{hwnn_layer_forward.3} parent=0 // loop_header_branch
    %11 = sbr.rel (%p9) target = $region8
  $region5: #{hwnn_layer_forward.3} parent=0 // loop_body
    %s13 = ssub.s32 %s8, 1
    %s14 = ssub.s32 %s8, 2
    %s15 = sadd.s32 %s8, 1
    %s16 = ssub.s32 %s8, %s15
    %p17 = scmp.eq.s32.totalorder %s16, 0
    %s19 = sadd.s32 %s18, 1
    %s20 = scalar_select %p17, %s18, %s19
    %p23 = pneg %p17
    %p24 = scmp.eq.s32.totalorder %s8, 1
    %p25 = por %p23, %p24
    %p26 = scmp.ne.s32.totalorder %s18, %s21
    %p27 = scmp.eq.s32.totalorder %s8, 0
    %p28 = por %p26, %p27
    %p29 = scmp.ne.s32.totalorder %s18, %s21
    %p30 = scmp.eq.s32.totalorder %s13, 1
    %p31 = por %p29, %p30
    %p32 = scmp.ne.s32.totalorder %s21, %s22
    %p33 = scmp.eq.s32.totalorder %s13, 0
    %p34 = por %p32, %p33
    %p35 = scmp.ne.s32.totalorder %s21, %s22
    %p36 = scmp.eq.s32.totalorder %s14, 1
    %p37 = por %p35, %p36
    %p39 = scmp.ne.s32.totalorder %s22, %s38
    %p40 = scmp.eq.s32.totalorder %s14, 0
    %p41 = por %p39, %p40
    %s43 = sadd.s32 %s42, 1
    %p46 = scmp.eq.s32.totalorder %s8, 1
    %p47 = scmp.ne.s32.totalorder %s42, %s44
    %p48 = scmp.eq.s32.totalorder %s8, 0
    %p49 = por %p47, %p48
    %p50 = scmp.ne.s32.totalorder %s42, %s44
    %p51 = scmp.eq.s32.totalorder %s13, 1
    %p52 = por %p50, %p51
    %p53 = scmp.ne.s32.totalorder %s44, %s45
    %p54 = scmp.eq.s32.totalorder %s13, 0
    %p55 = por %p53, %p54
    %p56 = scmp.ne.s32.totalorder %s44, %s45
    %p57 = scmp.eq.s32.totalorder %s14, 1
    %p58 = por %p56, %p57
    %p60 = scmp.ne.s32.totalorder %s45, %s59
    %p61 = scmp.eq.s32.totalorder %s14, 0
    %p62 = por %p60, %p61
    %s63 = ssub.s32 %s8, %s15
    %p64 = scmp.eq.s32.totalorder %s63, 0
    %s66 = sadd.s32 %s65, 1
    %s67 = scalar_select %p64, %s65, %s66
    %p70 = pneg %p64
    %p71 = scmp.eq.s32.totalorder %s8, 1
    %p72 = por %p70, %p71
    %p73 = scmp.ne.s32.totalorder %s65, %s68
    %p74 = scmp.eq.s32.totalorder %s8, 0
    %p75 = por %p73, %p74
    %p76 = scmp.ne.s32.totalorder %s65, %s68
    %p77 = scmp.eq.s32.totalorder %s13, 1
    %p78 = por %p76, %p77
    %p79 = scmp.ne.s32.totalorder %s68, %s69
    %p80 = scmp.eq.s32.totalorder %s13, 0
    %p81 = por %p79, %p80
    %p82 = scmp.ne.s32.totalorder %s68, %s69
    %p83 = scmp.eq.s32.totalorder %s14, 1
    %p84 = por %p82, %p83
    %p86 = scmp.ne.s32.totalorder %s69, %s85
    %p87 = scmp.eq.s32.totalorder %s14, 0
    %p88 = por %p86, %p87
    %p89 = scmp.le.s32.totalorder 1, %s8
    %p90 = scmp.lt.s32.totalorder %s8, 3
    %p91 = pnand %p89, %p90
    %p92 = pneg %p91
    // Predicated region
    $region9: #{hwnn_layer_forward.3} parent=5 // pred_check
      _
    $region10: #{hwnn_layer_forward.3} parent=5 // pred_check_branch
      %94 = sbr.rel (%p91) target = $region12
    $region11: #{hwnn_layer_forward.3} parent=5 // pred_region
      %s95 = ssub.s32 %s8, 1
      // Predicated region
      $region13: #{hwnn_layer_forward.3} parent=11 // pred_check
        %p96 = pneg %p55
      $region14: #{hwnn_layer_forward.3} parent=11 // pred_check_branch
        %98 = sbr.rel (%p96) target = $region16
      $region15: #{hwnn_layer_forward.3} parent=11 // pred_region
        _
      $region16: #{hwnn_layer_forward.3} parent=11 // pred_fallthru
        _
    $region12: #{hwnn_layer_forward.3} parent=5 // pred_fallthru
      _
    %p99 = scmp.lt.s32.totalorder %s8, 2
    // Predicated region
    $region17: #{hwnn_layer_forward.3} parent=5 // pred_check
      %p100 = pneg %p99
    $region18: #{hwnn_layer_forward.3} parent=5 // pred_check_branch
      %102 = sbr.rel (%p100) target = $region20
    $region19: #{hwnn_layer_forward.3} parent=5 // pred_region
      // Predicated region
      $region21: #{hwnn_layer_forward.3} parent=19 // pred_check
        %p103 = pneg %p28
      $region22: #{hwnn_layer_forward.3} parent=19 // pred_check_branch
        %105 = sbr.rel (%p103) target = $region24
      $region23: #{hwnn_layer_forward.3} parent=19 // pred_region
        %s106 = smul.u32 24, %s8
        %p107 = scmp.lt.s32.totalorder %s106, 47
        %s108 = scalar_select %p107, %s106, 47
        %s109 = smul.addr %s108, 3
        %s110 = smul.addr %s109, 4
        %s111 = scalar_lea.vmem %s0, %s110
        %s112 = smul.u32 24, %s8
      $region24: #{hwnn_layer_forward.3} parent=19 // pred_fallthru
        _
    $region20: #{hwnn_layer_forward.3} parent=5 // pred_fallthru
      _
    %p113 = scmp.le.s32.totalorder 1, %s8
    %p114 = scmp.lt.s32.totalorder %s8, 3
    %p115 = pnand %p113, %p114
    %p116 = pneg %p115
    // Predicated region
    $region25: #{hwnn_layer_forward.3} parent=5 // pred_check
      _
    $region26: #{hwnn_layer_forward.3} parent=5 // pred_check_branch
      %118 = sbr.rel (%p115) target = $region28
    $region27: #{hwnn_layer_forward.3} parent=5 // pred_region
      %s119 = ssub.s32 %s8, 1
      %s120 = smul.u32 24, %s13
      %p121 = scmp.lt.s32.totalorder %s120, 47
      %s122 = scalar_select %p121, %s120, 47
      %s123 = smul.addr %s122, 3
      %s124 = smul.addr %s123, 4
      %s125 = scalar_lea.vmem %s0, %s124
      %p126 = pneg %p34
      %p127 = pneg %p31
      %p128 = pneg %p55
      %p129 = pneg %p52
      %p130 = pneg %p81
      %p131 = pneg %p78
      %s132 = smul.u32 24, %s13
      %p133 = scmp.lt.s32.totalorder %s132, 47
      %s134 = scalar_select %p133, %s132, 47
      %s135 = smul.addr %s134, 8
      %s136 = scalar_lea.vmem %s2, %s135
      %s137 = smul.u32 24, %s13
      %p138 = scmp.lt.s32.totalorder %s137, 47
      %s139 = scalar_select %p138, %s137, 47
      %s140 = smul.addr %s139, 3
      %s141 = smul.addr %s140, 4
      %s142 = scalar_lea.vmem %s0, %s141
      %s143 = smul.u32 24, %s13
      %s144 = smul.u32 24, %s13
      %p145 = scmp.lt.s32.totalorder %s144, 47
      %s146 = scalar_select %p145, %s144, 47
      %s147 = smul.addr %s146, 8
      %s148 = scalar_lea.vmem %s2, %s147
      %s149 = smul.u32 24, %s13
      %v151 = vld [vmem:[%s142] sm:$0xff]
      %v152 = vld [vmem:[%s142 + $0x8] sm:$0xf]
      %v153 = vld [vmem:[%s142 + $0xc] sm:$0xff]
      %v154 = vld [vmem:[%s142 + $0x14] sm:$0xf]
      %v155 = vld [vmem:[%s142 + $0x18] sm:$0xff]
      %v156 = vld [vmem:[%s142 + $0x20] sm:$0xf]
      %v157 = vld [vmem:[%s142 + $0x24] sm:$0xff]
      %v158 = vld [vmem:[%s142 + $0x2c] sm:$0xf]
      %v159 = vld [vmem:[%s142 + $0x30] sm:$0xff]
      %v160 = vld [vmem:[%s142 + $0x38] sm:$0xf]
      %v161 = vld [vmem:[%s142 + $0x3c] sm:$0xff]
      %v162 = vld [vmem:[%s142 + $0x44] sm:$0xf]
      %v163 = vld [vmem:[%s142 + $0x48] sm:$0xff]
      %v164 = vld [vmem:[%s142 + $0x50] sm:$0xf]
      %v165 = vld [vmem:[%s142 + $0x54] sm:$0xff]
      %v166 = vld [vmem:[%s142 + $0x5c] sm:$0xf]
      %v167 = vld [vmem:[%s142 + $0x60] sm:$0xff]
      %v168 = vld [vmem:[%s142 + $0x68] sm:$0xf]
      %v169 = vld [vmem:[%s142 + $0x6c] sm:$0xff]
      %v170 = vld [vmem:[%s142 + $0x74] sm:$0xf]
      %v171 = vld [vmem:[%s142 + $0x78] sm:$0xff]
      %v172 = vld [vmem:[%s142 + $0x80] sm:$0xf]
      %v173 = vld [vmem:[%s142 + $0x84] sm:$0xff]
      %v174 = vld [vmem:[%s142 + $0x8c] sm:$0xf]
      %v175 = vld [vmem:[%s142 + $0x90] sm:$0xff]
      %v176 = vld [vmem:[%s142 + $0x98] sm:$0xf]
      %v177 = vld [vmem:[%s142 + $0x9c] sm:$0xff]
      %v178 = vld [vmem:[%s142 + $0xa4] sm:$0xf]
      %v179 = vld [vmem:[%s142 + $0xa8] sm:$0xff]
      %v180 = vld [vmem:[%s142 + $0xb0] sm:$0xf]
      %v181 = vld [vmem:[%s142 + $0xb4] sm:$0xff]
      %v182 = vld [vmem:[%s142 + $0xbc] sm:$0xf]
      %v183 = vld [vmem:[%s142 + $0xc0] sm:$0xff]
      %v184 = vld [vmem:[%s142 + $0xc8] sm:$0xf]
      %v185 = vld [vmem:[%s142 + $0xcc] sm:$0xff]
      %v186 = vld [vmem:[%s142 + $0xd4] sm:$0xf]
      %v187 = vld [vmem:[%s142 + $0xd8] sm:$0xff]
      %v188 = vld [vmem:[%s142 + $0xe0] sm:$0xf]
      %v189 = vld [vmem:[%s142 + $0xe4] sm:$0xff]
      %v190 = vld [vmem:[%s142 + $0xec] sm:$0xf]
      %v191 = vld [vmem:[%s142 + $0xf0] sm:$0xff]
      %v192 = vld [vmem:[%s142 + $0xf8] sm:$0xf]
      %v193 = vld [vmem:[%s142 + $0xfc] sm:$0xff]
      %v194 = vld [vmem:[%s142 + $0x104] sm:$0xf]
      %v195 = vld [vmem:[%s142 + $0x108] sm:$0xff]
      %v196 = vld [vmem:[%s142 + $0x110] sm:$0xf]
      %v197 = vld [vmem:[%s142 + $0x114] sm:$0xff]
      %v198 = vld [vmem:[%s142 + $0x11c] sm:$0xf]
      %v199 = vld [vmem:[%s1] sm:$0xf]
      %v200 = vld [vmem:[%s1 + $0x4] sm:$0xf]
      %v201 = vld [vmem:[%s1 + $0x8] sm:$0xf]
      %v202 = vld [vmem:[%s1 + $0xc] sm:$0xf]
      %v203 = vld [vmem:[%s1 + $0x10] sm:$0xf]
      %v204 = vld [vmem:[%s1 + $0x14] sm:$0xf]
      %v205 = vld [vmem:[%s1 + $0x18] sm:$0xf]
      %v206 = vld [vmem:[%s1 + $0x1c] sm:$0xf]
      %v207 = vld [vmem:[%s1 + $0x20] sm:$0xf]
      %v208 = vld [vmem:[%s1 + $0x24] sm:$0xf]
      %v209 = vld [vmem:[%s1 + $0x28] sm:$0xf]
      %v210 = vld [vmem:[%s1 + $0x2c] sm:$0xf]
      %v211 = vld [vmem:[%s1 + $0x30] sm:$0xf]
      %v212 = vld [vmem:[%s1 + $0x34] sm:$0xf]
      %v213 = vld [vmem:[%s1 + $0x38] sm:$0xf]
      %v214 = vld [vmem:[%s1 + $0x3c] sm:$0xf]
      %v215 = vld [vmem:[%s1 + $0x40] sm:$0xf]
      %v216 = vld [vmem:[%s1 + $0x44] sm:$0xf]
      %v217 = vld [vmem:[%s1 + $0x48] sm:$0xf]
      %v218 = vld [vmem:[%s1 + $0x4c] sm:$0xf]
      %v219 = vld [vmem:[%s1 + $0x50] sm:$0xf]
      %v220 = vld [vmem:[%s1 + $0x54] sm:$0xf]
      %v221 = vld [vmem:[%s1 + $0x58] sm:$0xf]
      %v222 = vld [vmem:[%s1 + $0x5c] sm:$0xf]
      %v223 = vld [vmem:[%s1 + $0x60] sm:$0xf]
      %v224 = vld [vmem:[%s1 + $0x64] sm:$0xf]
      %v225 = vld [vmem:[%s1 + $0x68] sm:$0xf]
      %v226 = vld [vmem:[%s1 + $0x6c] sm:$0xf]
      %v227 = vld [vmem:[%s1 + $0x70] sm:$0xf]
      %v228 = vld [vmem:[%s1 + $0x74] sm:$0xf]
      %v229 = vld [vmem:[%s1 + $0x78] sm:$0xf]
      %v230 = vld [vmem:[%s1 + $0x7c] sm:$0xf]
      %v231 = vld [vmem:[%s1 + $0x80] sm:$0xf]
      %v232 = vld [vmem:[%s1 + $0x84] sm:$0xf]
      %v233 = vld [vmem:[%s1 + $0x88] sm:$0xf]
      %v234 = vld [vmem:[%s1 + $0x8c] sm:$0xf]
      %v235 = vld [vmem:[%s1 + $0x90] sm:$0xf]
      %v236 = vld [vmem:[%s1 + $0x94] sm:$0xf]
      %v237 = vld [vmem:[%s1 + $0x98] sm:$0xf]
      %v238 = vld [vmem:[%s1 + $0x9c] sm:$0xf]
      %v239 = vld [vmem:[%s1 + $0xa0] sm:$0xf]
      %v240 = vld [vmem:[%s1 + $0xa4] sm:$0xf]
      %v241 = vld [vmem:[%s1 + $0xa8] sm:$0xf]
      %v242 = vld [vmem:[%s1 + $0xac] sm:$0xf]
      %v243 = vld [vmem:[%s1 + $0xb0] sm:$0xf]
      %v244 = vld [vmem:[%s1 + $0xb4] sm:$0xf]
      %v245 = vld [vmem:[%s1 + $0xb8] sm:$0xf]
      %v246 = vld [vmem:[%s1 + $0xbc] sm:$0xf]
      %v295 = vunpack.c.l.b16 %v151
      %v296 = vunpack.c.h.b16 %v151
      %v297 = vunpack.c.l.b16 %v152
      %v298 = vunpack.c.l.b16 %v153
      %v299 = vunpack.c.h.b16 %v153
      %v300 = vunpack.c.l.b16 %v154
      %v301 = vunpack.c.l.b16 %v155
      %v302 = vunpack.c.h.b16 %v155
      %v303 = vunpack.c.l.b16 %v156
      %v304 = vunpack.c.l.b16 %v157
      %v305 = vunpack.c.h.b16 %v157
      %v306 = vunpack.c.l.b16 %v158
      %v307 = vunpack.c.l.b16 %v159
      %v308 = vunpack.c.h.b16 %v159
      %v309 = vunpack.c.l.b16 %v160
      %v310 = vunpack.c.l.b16 %v161
      %v311 = vunpack.c.h.b16 %v161
      %v312 = vunpack.c.l.b16 %v162
      %v313 = vunpack.c.l.b16 %v163
      %v314 = vunpack.c.h.b16 %v163
      %v315 = vunpack.c.l.b16 %v164
      %v316 = vunpack.c.l.b16 %v165
      %v317 = vunpack.c.h.b16 %v165
      %v318 = vunpack.c.l.b16 %v166
      %v319 = vunpack.c.l.b16 %v167
      %v320 = vunpack.c.h.b16 %v167
      %v321 = vunpack.c.l.b16 %v168
      %v322 = vunpack.c.l.b16 %v169
      %v323 = vunpack.c.h.b16 %v169
      %v324 = vunpack.c.l.b16 %v170
      %v325 = vunpack.c.l.b16 %v171
      %v326 = vunpack.c.h.b16 %v171
      %v327 = vunpack.c.l.b16 %v172
      %v328 = vunpack.c.l.b16 %v173
      %v329 = vunpack.c.h.b16 %v173
      %v330 = vunpack.c.l.b16 %v174
      %v331 = vunpack.c.l.b16 %v175
      %v332 = vunpack.c.h.b16 %v175
      %v333 = vunpack.c.l.b16 %v176
      %v334 = vunpack.c.l.b16 %v177
      %v335 = vunpack.c.h.b16 %v177
      %v336 = vunpack.c.l.b16 %v178
      %v337 = vunpack.c.l.b16 %v179
      %v338 = vunpack.c.h.b16 %v179
      %v339 = vunpack.c.l.b16 %v180
      %v340 = vunpack.c.l.b16 %v181
      %v341 = vunpack.c.h.b16 %v181
      %v342 = vunpack.c.l.b16 %v182
      %v343 = vunpack.c.l.b16 %v183
      %v344 = vunpack.c.h.b16 %v183
      %v345 = vunpack.c.l.b16 %v184
      %v346 = vunpack.c.l.b16 %v185
      %v347 = vunpack.c.h.b16 %v185
      %v348 = vunpack.c.l.b16 %v186
      %v349 = vunpack.c.l.b16 %v187
      %v350 = vunpack.c.h.b16 %v187
      %v351 = vunpack.c.l.b16 %v188
      %v352 = vunpack.c.l.b16 %v189
      %v353 = vunpack.c.h.b16 %v189
      %v354 = vunpack.c.l.b16 %v190
      %v355 = vunpack.c.l.b16 %v191
      %v356 = vunpack.c.h.b16 %v191
      %v357 = vunpack.c.l.b16 %v192
      %v358 = vunpack.c.l.b16 %v193
      %v359 = vunpack.c.h.b16 %v193
      %v360 = vunpack.c.l.b16 %v194
      %v361 = vunpack.c.l.b16 %v195
      %v362 = vunpack.c.h.b16 %v195
      %v363 = vunpack.c.l.b16 %v196
      %v364 = vunpack.c.l.b16 %v197
      %v365 = vunpack.c.h.b16 %v197
      %v366 = vunpack.c.l.b16 %v198
      %v367 = vpack.c.b16 %v298, %v295
      %v368 = vpack.c.b16 %v299, %v296
      %v369 = vpack.c.b16 %v300, %v297
      %v370 = vpack.c.b16 %v304, %v301
      %v371 = vpack.c.b16 %v305, %v302
      %v372 = vpack.c.b16 %v306, %v303
      %v373 = vpack.c.b16 %v310, %v307
      %v374 = vpack.c.b16 %v311, %v308
      %v375 = vpack.c.b16 %v312, %v309
      %v376 = vpack.c.b16 %v316, %v313
      %v377 = vpack.c.b16 %v317, %v314
      %v378 = vpack.c.b16 %v318, %v315
      %v379 = vpack.c.b16 %v322, %v319
      %v380 = vpack.c.b16 %v323, %v320
      %v381 = vpack.c.b16 %v324, %v321
      %v382 = vpack.c.b16 %v328, %v325
      %v383 = vpack.c.b16 %v329, %v326
      %v384 = vpack.c.b16 %v330, %v327
      %v385 = vpack.c.b16 %v334, %v331
      %v386 = vpack.c.b16 %v335, %v332
      %v387 = vpack.c.b16 %v336, %v333
      %v388 = vpack.c.b16 %v340, %v337
      %v389 = vpack.c.b16 %v341, %v338
      %v390 = vpack.c.b16 %v342, %v339
      %v391 = vpack.c.b16 %v346, %v343
      %v392 = vpack.c.b16 %v347, %v344
      %v393 = vpack.c.b16 %v348, %v345
      %v394 = vpack.c.b16 %v352, %v349
      %v395 = vpack.c.b16 %v353, %v350
      %v396 = vpack.c.b16 %v354, %v351
      %v397 = vpack.c.b16 %v358, %v355
      %v398 = vpack.c.b16 %v359, %v356
      %v399 = vpack.c.b16 %v360, %v357
      %v400 = vpack.c.b16 %v364, %v361
      %v401 = vpack.c.b16 %v365, %v362
      %v402 = vpack.c.b16 %v366, %v363
      %v487 = vunpack.c.l.b16 %v199
      %v488 = vunpack.c.l.b16 %v200
      %v489 = vunpack.c.l.b16 %v201
      %v490 = vunpack.c.l.b16 %v202
      %v491 = vunpack.c.l.b16 %v203
      %v492 = vunpack.c.l.b16 %v204
      %v493 = vunpack.c.l.b16 %v205
      %v494 = vunpack.c.l.b16 %v206
      %v495 = vunpack.c.l.b16 %v207
      %v496 = vunpack.c.l.b16 %v208
      %v497 = vunpack.c.l.b16 %v209
      %v498 = vunpack.c.l.b16 %v210
      %v499 = vunpack.c.l.b16 %v211
      %v500 = vunpack.c.l.b16 %v212
      %v501 = vunpack.c.l.b16 %v213
      %v502 = vunpack.c.l.b16 %v214
      %v503 = vunpack.c.l.b16 %v215
      %v504 = vunpack.c.l.b16 %v216
      %v505 = vunpack.c.l.b16 %v217
      %v506 = vunpack.c.l.b16 %v218
      %v507 = vunpack.c.l.b16 %v219
      %v508 = vunpack.c.l.b16 %v220
      %v509 = vunpack.c.l.b16 %v221
      %v510 = vunpack.c.l.b16 %v222
      %v511 = vunpack.c.l.b16 %v223
      %v512 = vunpack.c.l.b16 %v224
      %v513 = vunpack.c.l.b16 %v225
      %v514 = vunpack.c.l.b16 %v226
      %v515 = vunpack.c.l.b16 %v227
      %v516 = vunpack.c.l.b16 %v228
      %v517 = vunpack.c.l.b16 %v229
      %v518 = vunpack.c.l.b16 %v230
      %v519 = vunpack.c.l.b16 %v231
      %v520 = vunpack.c.l.b16 %v232
      %v521 = vunpack.c.l.b16 %v233
      %v522 = vunpack.c.l.b16 %v234
      %v523 = vunpack.c.l.b16 %v235
      %v524 = vunpack.c.l.b16 %v236
      %v525 = vunpack.c.l.b16 %v237
      %v526 = vunpack.c.l.b16 %v238
      %v527 = vunpack.c.l.b16 %v239
      %v528 = vunpack.c.l.b16 %v240
      %v529 = vunpack.c.l.b16 %v241
      %v530 = vunpack.c.l.b16 %v242
      %v531 = vunpack.c.l.b16 %v243
      %v532 = vunpack.c.l.b16 %v244
      %v533 = vunpack.c.l.b16 %v245
      %v534 = vunpack.c.l.b16 %v246
      %v535 = vpack.c.b16 %v488, %v487
      %v536 = vpack.c.b16 %v490, %v489
      %v537 = vpack.c.b16 %v492, %v491
      %v538 = vpack.c.b16 %v494, %v493
      %v539 = vpack.c.b16 %v496, %v495
      %v540 = vpack.c.b16 %v498, %v497
      %v541 = vpack.c.b16 %v500, %v499
      %v542 = vpack.c.b16 %v502, %v501
      %v543 = vpack.c.b16 %v504, %v503
      %v544 = vpack.c.b16 %v506, %v505
      %v545 = vpack.c.b16 %v508, %v507
      %v546 = vpack.c.b16 %v510, %v509
      %v547 = vpack.c.b16 %v512, %v511
      %v548 = vpack.c.b16 %v514, %v513
      %v549 = vpack.c.b16 %v516, %v515
      %v550 = vpack.c.b16 %v518, %v517
      %v551 = vpack.c.b16 %v520, %v519
      %v552 = vpack.c.b16 %v522, %v521
      %v553 = vpack.c.b16 %v524, %v523
      %v554 = vpack.c.b16 %v526, %v525
      %v555 = vpack.c.b16 %v528, %v527
      %v556 = vpack.c.b16 %v530, %v529
      %v557 = vpack.c.b16 %v532, %v531
      %v558 = vpack.c.b16 %v534, %v533
      %583 = vmatprep.subr.bf16.mxu0 0
      %584 = vmatpush1.bf16.msra.mxu0 %v535
      %585 = vmatprep.subr.bf16.mxu0 0
      %586 = vmatpush1.bf16.msra.mxu0 %v536
      %587 = vmatprep.subr.bf16.mxu0 0
      %588 = vmatpush1.bf16.msra.mxu0 %v537
      %589 = vmatprep.subr.bf16.mxu0 0
      %590 = vmatpush1.bf16.msra.mxu0 %v538
      %591 = vmatprep.subr.bf16.mxu0 0
      %592 = vmatpush1.bf16.msra.mxu0 %v539
      %593 = vmatprep.subr.bf16.mxu0 0
      %594 = vmatpush1.bf16.msra.mxu0 %v540
      %595 = vmatprep.subr.bf16.mxu0 0
      %596 = vmatpush1.bf16.msra.mxu0 %v541
      %597 = vmatprep.subr.bf16.mxu0 0
      %598 = vmatpush1.bf16.msra.mxu0 %v542
      %599 = vmatprep.subr.bf16.mxu0 0
      %600 = vmatpush1.bf16.msra.mxu0 %v543
      %601 = vmatprep.subr.bf16.mxu0 0
      %602 = vmatpush1.bf16.msra.mxu0 %v544
      %603 = vmatprep.subr.bf16.mxu0 0
      %604 = vmatpush1.bf16.msra.mxu0 %v545
      %605 = vmatprep.subr.bf16.mxu0 0
      %606 = vmatpush1.bf16.msra.mxu0 %v546
      %607 = vmatprep.subr.bf16.mxu0 0
      %608 = vmatpush1.bf16.msra.mxu0 %v547
      %609 = vmatprep.subr.bf16.mxu0 0
      %610 = vmatpush1.bf16.msra.mxu0 %v548
      %611 = vmatprep.subr.bf16.mxu0 0
      %612 = vmatpush1.bf16.msra.mxu0 %v549
      %613 = vmatprep.subr.bf16.mxu0 0
      %614 = vmatpush1.bf16.msra.mxu0 %v550
      %615 = vmatprep.mubr.bf16.mxu0 %v368
      %616 = vmatmul.mubr.bf16.gmra.mrb[0].mxu0 %v367
      %v617 = vpop.f32.mrb[0].mxu0
      %v618 = vadd.f32 0.0, %v617
      %v619 = vpop.f32.mrb[0].mxu0
      %v620 = vpop.f32.mrb[0].mxu0
      %v621 = vadd.f32 0.0, %v620
      %v622 = vpop.f32.mrb[0].mxu0
      %623 = vmatprep.mubr.bf16.mxu0 %v371
      %624 = vmatmul.mubr.bf16.gmra.mrb[0].mxu0 %v370
      %v625 = vpop.f32.mrb[0].mxu0
      %v626 = vadd.f32 0.0, %v625
      %v627 = vpop.f32.mrb[0].mxu0
      %v628 = vpop.f32.mrb[0].mxu0
      %v629 = vadd.f32 0.0, %v628
      %v630 = vpop.f32.mrb[0].mxu0
      %631 = vmatprep.mubr.bf16.mxu0 %v374
      %632 = vmatmul.mubr.bf16.gmra.mrb[0].mxu0 %v373
      %v633 = vpop.f32.mrb[0].mxu0
      %v634 = vadd.f32 0.0, %v633
      %v635 = vpop.f32.mrb[0].mxu0
      %v636 = vpop.f32.mrb[0].mxu0
      %v637 = vadd.f32 0.0, %v636
      %v638 = vpop.f32.mrb[0].mxu0
      %639 = vmatprep.mubr.bf16.mxu0 %v377
      %640 = vmatmul.mubr.bf16.gmra.mrb[0].mxu0 %v376
      %v641 = vpop.f32.mrb[0].mxu0
      %v642 = vadd.f32 0.0, %v641
      %v643 = vpop.f32.mrb[0].mxu0
      %v644 = vpop.f32.mrb[0].mxu0
      %v645 = vadd.f32 0.0, %v644
      %v646 = vpop.f32.mrb[0].mxu0
      %647 = vmatprep.mubr.bf16.mxu0 %v380
      %648 = vmatmul.mubr.bf16.gmra.mrb[0].mxu0 %v379
      %v649 = vpop.f32.mrb[0].mxu0
      %v650 = vadd.f32 0.0, %v649
      %v651 = vpop.f32.mrb[0].mxu0
      %v652 = vpop.f32.mrb[0].mxu0
      %v653 = vadd.f32 0.0, %v652
      %v654 = vpop.f32.mrb[0].mxu0
      %655 = vmatprep.mubr.bf16.mxu0 %v383
      %656 = vmatmul.mubr.bf16.gmra.mrb[0].mxu0 %v382
      %v657 = vpop.f32.mrb[0].mxu0
      %v658 = vadd.f32 0.0, %v657
      %v659 = vpop.f32.mrb[0].mxu0
      %v660 = vpop.f32.mrb[0].mxu0
      %v661 = vadd.f32 0.0, %v660
      %v662 = vpop.f32.mrb[0].mxu0
      %663 = vmatprep.mubr.bf16.mxu0 %v386
      %664 = vmatmul.mubr.bf16.gmra.mrb[0].mxu0 %v385
      %v665 = vpop.f32.mrb[0].mxu0
      %v666 = vadd.f32 0.0, %v665
      %v667 = vpop.f32.mrb[0].mxu0
      %v668 = vpop.f32.mrb[0].mxu0
      %v669 = vadd.f32 0.0, %v668
      %v670 = vpop.f32.mrb[0].mxu0
      %671 = vmatprep.mubr.bf16.mxu0 %v389
      %672 = vmatmul.mubr.bf16.gmra.mrb[0].mxu0 %v388
      %v673 = vpop.f32.mrb[0].mxu0
      %v674 = vadd.f32 0.0, %v673
      %v675 = vpop.f32.mrb[0].mxu0
      %v676 = vpop.f32.mrb[0].mxu0
      %v677 = vadd.f32 0.0, %v676
      %v678 = vpop.f32.mrb[0].mxu0
      %679 = vmatprep.mubr.bf16.mxu0 %v392
      %680 = vmatmul.mubr.bf16.gmra.mrb[0].mxu0 %v391
      %v681 = vpop.f32.mrb[0].mxu0
      %v682 = vadd.f32 0.0, %v681
      %v683 = vpop.f32.mrb[0].mxu0
      %v684 = vpop.f32.mrb[0].mxu0
      %v685 = vadd.f32 0.0, %v684
      %v686 = vpop.f32.mrb[0].mxu0
      %687 = vmatprep.mubr.bf16.mxu0 %v395
      %688 = vmatmul.mubr.bf16.gmra.mrb[0].mxu0 %v394
      %v689 = vpop.f32.mrb[0].mxu0
      %v690 = vadd.f32 0.0, %v689
      %v691 = vpop.f32.mrb[0].mxu0
      %v692 = vpop.f32.mrb[0].mxu0
      %v693 = vadd.f32 0.0, %v692
      %v694 = vpop.f32.mrb[0].mxu0
      %695 = vmatprep.mubr.bf16.mxu0 %v398
      %696 = vmatmul.mubr.bf16.gmra.mrb[0].mxu0 %v397
      %v697 = vpop.f32.mrb[0].mxu0
      %v698 = vadd.f32 0.0, %v697
      %v699 = vpop.f32.mrb[0].mxu0
      %v700 = vpop.f32.mrb[0].mxu0
      %v701 = vadd.f32 0.0, %v700
      %v702 = vpop.f32.mrb[0].mxu0
      %703 = vmatprep.mubr.bf16.mxu0 %v401
      %704 = vmatmul.mubr.bf16.gmra.mrb[0].mxu0 %v400
      %v705 = vpop.f32.mrb[0].mxu0
      %v706 = vadd.f32 0.0, %v705
      %v707 = vpop.f32.mrb[0].mxu0
      %v708 = vpop.f32.mrb[0].mxu0
      %v709 = vadd.f32 0.0, %v708
      %v710 = vpop.f32.mrb[0].mxu0
      %711 = vdwg.mxu0
      %712 = vmatprep.subr.bf16.mxu0 0
      %713 = vmatpush1.bf16.msra.mxu0 %v551
      %714 = vmatprep.subr.bf16.mxu0 0
      %715 = vmatpush1.bf16.msra.mxu0 %v552
      %716 = vmatprep.subr.bf16.mxu0 0
      %717 = vmatpush1.bf16.msra.mxu0 %v553
      %718 = vmatprep.subr.bf16.mxu0 0
      %719 = vmatpush1.bf16.msra.mxu0 %v554
      %720 = vmatprep.subr.bf16.mxu0 0
      %721 = vmatpush1.bf16.msra.mxu0 %v555
      %722 = vmatprep.subr.bf16.mxu0 0
      %723 = vmatpush1.bf16.msra.mxu0 %v556
      %724 = vmatprep.subr.bf16.mxu0 0
      %725 = vmatpush1.bf16.msra.mxu0 %v557
      %726 = vmatprep.subr.bf16.mxu0 0
      %727 = vmatpush1.bf16.msra.mxu0 %v558
      %728 = vmatprep.subr.bf16.mxu0 0
      %729 = vmatpush1.bf16.msra.mxu0 0
      %730 = vmatprep.subr.bf16.mxu0 0
      %731 = vmatpush1.bf16.msra.mxu0 0
      %732 = vmatprep.subr.bf16.mxu0 0
      %733 = vmatpush1.bf16.msra.mxu0 0
      %734 = vmatprep.subr.bf16.mxu0 0
      %735 = vmatpush1.bf16.msra.mxu0 0
      %736 = vmatprep.subr.bf16.mxu0 0
      %737 = vmatpush1.bf16.msra.mxu0 0
      %738 = vmatprep.subr.bf16.mxu0 0
      %739 = vmatpush1.bf16.msra.mxu0 0
      %740 = vmatprep.subr.bf16.mxu0 0
      %741 = vmatpush1.bf16.msra.mxu0 0
      %742 = vmatprep.subr.bf16.mxu0 0
      %743 = vmatpush1.bf16.msra.mxu0 0
      %744 = vmatprep.mubr.bf16.mxu0 0
      %745 = vmatmul.mubr.bf16.gmra.mrb[0].mxu0 %v369
      %v746 = vpop.f32.mrb[0].mxu0
      %v747 = vadd.f32 %v618, %v746
      %v748 = vpop.f32.mrb[0].mxu0
      %v749 = vpop.f32.mrb[0].mxu0
      %v750 = vadd.f32 %v621, %v749
      %v751 = vpop.f32.mrb[0].mxu0
      %752 = vmatprep.mubr.bf16.mxu0 0
      %753 = vmatmul.mubr.bf16.gmra.mrb[0].mxu0 %v372
      %v754 = vpop.f32.mrb[0].mxu0
      %v755 = vadd.f32 %v626, %v754
      %v756 = vpop.f32.mrb[0].mxu0
      %v757 = vpop.f32.mrb[0].mxu0
      %v758 = vadd.f32 %v629, %v757
      %v759 = vpop.f32.mrb[0].mxu0
      %760 = vmatprep.mubr.bf16.mxu0 0
      %761 = vmatmul.mubr.bf16.gmra.mrb[0].mxu0 %v375
      %v762 = vpop.f32.mrb[0].mxu0
      %v763 = vadd.f32 %v634, %v762
      %v764 = vpop.f32.mrb[0].mxu0
      %v765 = vpop.f32.mrb[0].mxu0
      %v766 = vadd.f32 %v637, %v765
      %v767 = vpop.f32.mrb[0].mxu0
      %768 = vmatprep.mubr.bf16.mxu0 0
      %769 = vmatmul.mubr.bf16.gmra.mrb[0].mxu0 %v378
      %v770 = vpop.f32.mrb[0].mxu0
      %v771 = vadd.f32 %v642, %v770
      %v772 = vpop.f32.mrb[0].mxu0
      %v773 = vpop.f32.mrb[0].mxu0
      %v774 = vadd.f32 %v645, %v773
      %v775 = vpop.f32.mrb[0].mxu0
      %776 = vmatprep.mubr.bf16.mxu0 0
      %777 = vmatmul.mubr.bf16.gmra.mrb[0].mxu0 %v381
      %v778 = vpop.f32.mrb[0].mxu0
      %v779 = vadd.f32 %v650, %v778
      %v780 = vpop.f32.mrb[0].mxu0
      %v781 = vpop.f32.mrb[0].mxu0
      %v782 = vadd.f32 %v653, %v781
      %v783 = vpop.f32.mrb[0].mxu0
      %784 = vmatprep.mubr.bf16.mxu0 0
      %785 = vmatmul.mubr.bf16.gmra.mrb[0].mxu0 %v384
      %v786 = vpop.f32.mrb[0].mxu0
      %v787 = vadd.f32 %v658, %v786
      %v788 = vpop.f32.mrb[0].mxu0
      %v789 = vpop.f32.mrb[0].mxu0
      %v790 = vadd.f32 %v661, %v789
      %v791 = vpop.f32.mrb[0].mxu0
      %792 = vmatprep.mubr.bf16.mxu0 0
      %793 = vmatmul.mubr.bf16.gmra.mrb[0].mxu0 %v387
      %v794 = vpop.f32.mrb[0].mxu0
      %v795 = vadd.f32 %v666, %v794
      %v796 = vpop.f32.mrb[0].mxu0
      %v797 = vpop.f32.mrb[0].mxu0
      %v798 = vadd.f32 %v669, %v797
      %v799 = vpop.f32.mrb[0].mxu0
      %800 = vmatprep.mubr.bf16.mxu0 0
      %801 = vmatmul.mubr.bf16.gmra.mrb[0].mxu0 %v390
      %v802 = vpop.f32.mrb[0].mxu0
      %v803 = vadd.f32 %v674, %v802
      %v804 = vpop.f32.mrb[0].mxu0
      %v805 = vpop.f32.mrb[0].mxu0
      %v806 = vadd.f32 %v677, %v805
      %v807 = vpop.f32.mrb[0].mxu0
      %808 = vmatprep.mubr.bf16.mxu0 0
      %809 = vmatmul.mubr.bf16.gmra.mrb[0].mxu0 %v393
      %v810 = vpop.f32.mrb[0].mxu0
      %v811 = vadd.f32 %v682, %v810
      %v812 = vpop.f32.mrb[0].mxu0
      %v813 = vpop.f32.mrb[0].mxu0
      %v814 = vadd.f32 %v685, %v813
      %v815 = vpop.f32.mrb[0].mxu0
      %816 = vmatprep.mubr.bf16.mxu0 0
      %817 = vmatmul.mubr.bf16.gmra.mrb[0].mxu0 %v396
      %v818 = vpop.f32.mrb[0].mxu0
      %v819 = vadd.f32 %v690, %v818
      %v820 = vpop.f32.mrb[0].mxu0
      %v821 = vpop.f32.mrb[0].mxu0
      %v822 = vadd.f32 %v693, %v821
      %v823 = vpop.f32.mrb[0].mxu0
      %824 = vmatprep.mubr.bf16.mxu0 0
      %825 = vmatmul.mubr.bf16.gmra.mrb[0].mxu0 %v399
      %v826 = vpop.f32.mrb[0].mxu0
      %v827 = vadd.f32 %v698, %v826
      %v828 = vpop.f32.mrb[0].mxu0
      %v829 = vpop.f32.mrb[0].mxu0
      %v830 = vadd.f32 %v701, %v829
      %v831 = vpop.f32.mrb[0].mxu0
      %832 = vmatprep.mubr.bf16.mxu0 0
      %833 = vmatmul.mubr.bf16.gmra.mrb[0].mxu0 %v402
      %v834 = vpop.f32.mrb[0].mxu0
      %v835 = vadd.f32 %v706, %v834
      %v836 = vpop.f32.mrb[0].mxu0
      %v837 = vpop.f32.mrb[0].mxu0
      %v838 = vadd.f32 %v709, %v837
      %v839 = vpop.f32.mrb[0].mxu0
      %840 = vdwg.mxu0
      %841 = vst [vmem:[%s148] sm:$0xff] %v747
      %842 = vst [vmem:[%s148 + $0x8] sm:$0xff] %v750
      %843 = vst [vmem:[%s148 + $0x10] sm:$0xff] %v755
      %844 = vst [vmem:[%s148 + $0x18] sm:$0xff] %v758
      %845 = vst [vmem:[%s148 + $0x20] sm:$0xff] %v763
      %846 = vst [vmem:[%s148 + $0x28] sm:$0xff] %v766
      %847 = vst [vmem:[%s148 + $0x30] sm:$0xff] %v771
      %848 = vst [vmem:[%s148 + $0x38] sm:$0xff] %v774
      %849 = vst [vmem:[%s148 + $0x40] sm:$0xff] %v779
      %850 = vst [vmem:[%s148 + $0x48] sm:$0xff] %v782
      %851 = vst [vmem:[%s148 + $0x50] sm:$0xff] %v787
      %852 = vst [vmem:[%s148 + $0x58] sm:$0xff] %v790
      %853 = vst [vmem:[%s148 + $0x60] sm:$0xff] %v795
      %854 = vst [vmem:[%s148 + $0x68] sm:$0xff] %v798
      %855 = vst [vmem:[%s148 + $0x70] sm:$0xff] %v803
      %856 = vst [vmem:[%s148 + $0x78] sm:$0xff] %v806
      %857 = vst [vmem:[%s148 + $0x80] sm:$0xff] %v811
      %858 = vst [vmem:[%s148 + $0x88] sm:$0xff] %v814
      %859 = vst [vmem:[%s148 + $0x90] sm:$0xff] %v819
      %860 = vst [vmem:[%s148 + $0x98] sm:$0xff] %v822
      %861 = vst [vmem:[%s148 + $0xa0] sm:$0xff] %v827
      %862 = vst [vmem:[%s148 + $0xa8] sm:$0xff] %v830
      %863 = vst [vmem:[%s148 + $0xb0] sm:$0xff] %v835
      %864 = vst [vmem:[%s148 + $0xb8] sm:$0xff] %v838
      %s865 = smul.u32 24, %s13
      %p866 = scmp.lt.s32.totalorder %s865, 47
      %s867 = scalar_select %p866, %s865, 47
      %s868 = smul.addr %s867, 8
      %s869 = scalar_lea.vmem %s2, %s868
      // Predicated region
      $region29: #{hwnn_layer_forward.3} parent=27 // pred_check
        %p870 = pneg %p78
      $region30: #{hwnn_layer_forward.3} parent=27 // pred_check_branch
        %872 = sbr.rel (%p870) target = $region32
      $region31: #{hwnn_layer_forward.3} parent=27 // pred_region
        %s873 = smul.u32 24, %s13
      $region32: #{hwnn_layer_forward.3} parent=27 // pred_fallthru
        _
    $region28: #{hwnn_layer_forward.3} parent=5 // pred_fallthru
      _
    %p874 = scmp.le.s32.totalorder 2, %s8
    // Predicated region
    $region33: #{hwnn_layer_forward.3} parent=5 // pred_check
      %p875 = pneg %p874
    $region34: #{hwnn_layer_forward.3} parent=5 // pred_check_branch
      %877 = sbr.rel (%p875) target = $region36
    $region35: #{hwnn_layer_forward.3} parent=5 // pred_region
      %s878 = ssub.s32 %s8, 2
      // Predicated region
      $region37: #{hwnn_layer_forward.3} parent=35 // pred_check
        %p879 = pneg %p84
      $region38: #{hwnn_layer_forward.3} parent=35 // pred_check_branch
        %881 = sbr.rel (%p879) target = $region40
      $region39: #{hwnn_layer_forward.3} parent=35 // pred_region
        %s882 = smul.u32 24, %s14
        %p883 = scmp.lt.s32.totalorder %s882, 47
        %s884 = scalar_select %p883, %s882, 47
        %s885 = smul.addr %s884, 8
        %s886 = scalar_lea.vmem %s2, %s885
      $region40: #{hwnn_layer_forward.3} parent=35 // pred_fallthru
        _
    $region36: #{hwnn_layer_forward.3} parent=5 // pred_fallthru
      _
  $region6: #{hwnn_layer_forward.3} parent=0 // loop_footer
    %s12 = sadd.s32 1, %s8
  $region7: #{hwnn_layer_forward.3} parent=0 // loop_footer_branch
    %7 = sbr.rel target = $region3
  $region8: #{hwnn_layer_forward.3} parent=0 // loop_exit
    _

// kernel: hwnn_layer_forward.2
$region0: #{hwnn_layer_forward.2}
  #allocation0 [shape = 'u32[]', space=smem, size = 0x4, offset = 0x4, fixed_abs, tag = 'smem constant byte address 0x4 - core index']
  #allocation1 [shape = 'u32[144,128]{1,0:T(1,128)}', space=vmem, size = 0x12000, scoped, tag = 'internal scratch']
  %s0 = inlined_call_operand.vmem [shape: bf16[384,384], index: 0, kind: input, shape index: {}]
  %s1 = inlined_call_operand.vmem [shape: bf16[384,128], index: 1, kind: input, shape index: {}]
  %s2 = inlined_call_operand.vmem [shape: bf16[128,128], index: 2, kind: input, shape index: {}]
  %s3 = inlined_call_operand.vmem [shape: f32[384,1], index: 3, kind: input, shape index: {}]
  %s4 = inlined_call_operand.vmem [shape: bf16[384,128], index: 4, kind: output, shape index: {}]
  %s5 = sld [smem:[#allocation0]]
  $region49: #{hwnn_layer_forward.2} parent=0
    _
  %s7 = ssub.s32 1, %s5
  %s8 = scalar_select 0, %s7, %s5
  loop: start=0, step=1, limit=4
  $region2: #{hwnn_layer_forward.2} parent=0 // loop_pre_header
    _
  $region3: #{hwnn_layer_forward.2} parent=0 // loop_header
    %s10 = sphi 0, %s14
    %p11 = scmp.ge.s32.totalorder %s10, 4
    %s20 = sphi 0, %s22
    %s23 = sphi 0, %s20
    %s24 = sphi 0, %s23
    %s40 = sphi 0, %s24
    %s44 = sphi 0, %s44
    %s46 = sphi 0, %s44
    %s47 = sphi 0, %s46
    %s61 = sphi 0, %s47
    %s65 = sphi 0, %s65
    %s67 = sphi 0, %s65
    %s68 = sphi 0, %s67
    %s82 = sphi 0, %s68
    %s88 = sphi 0, %s90
    %s91 = sphi 0, %s88
    %s92 = sphi 0, %s91
    %s108 = sphi 0, %s92
    %s114 = sphi 0, %s116
    %s117 = sphi 0, %s114
    %s118 = sphi 0, %s117
    %s134 = sphi 0, %s118
  $region4: #{hwnn_layer_forward.2} parent=0 // loop_header_branch
    %13 = sbr.rel (%p11) target = $region8
  $region5: #{hwnn_layer_forward.2} parent=0 // loop_body
    %s15 = ssub.s32 %s10, 1
    %s16 = ssub.s32 %s10, 2
    %s17 = sadd.s32 %s10, 1
    %s18 = ssub.s32 %s10, %s17
    %p19 = scmp.eq.s32.totalorder %s18, 0
    %s21 = sadd.s32 %s20, 1
    %s22 = scalar_select %p19, %s20, %s21
    %p25 = pneg %p19
    %p26 = scmp.eq.s32.totalorder %s10, 1
    %p27 = por %p25, %p26
    %p28 = scmp.ne.s32.totalorder %s20, %s23
    %p29 = scmp.eq.s32.totalorder %s10, 0
    %p30 = por %p28, %p29
    %p31 = scmp.ne.s32.totalorder %s20, %s23
    %p32 = scmp.eq.s32.totalorder %s15, 1
    %p33 = por %p31, %p32
    %p34 = scmp.ne.s32.totalorder %s23, %s24
    %p35 = scmp.eq.s32.totalorder %s15, 0
    %p36 = por %p34, %p35
    %p37 = scmp.ne.s32.totalorder %s23, %s24
    %p38 = scmp.eq.s32.totalorder %s16, 1
    %p39 = por %p37, %p38
    %p41 = scmp.ne.s32.totalorder %s24, %s40
    %p42 = scmp.eq.s32.totalorder %s16, 0
    %p43 = por %p41, %p42
    %s45 = sadd.s32 %s44, 1
    %p48 = scmp.eq.s32.totalorder %s10, 1
    %p49 = scmp.ne.s32.totalorder %s44, %s46
    %p50 = scmp.eq.s32.totalorder %s10, 0
    %p51 = por %p49, %p50
    %p52 = scmp.ne.s32.totalorder %s44, %s46
    %p53 = scmp.eq.s32.totalorder %s15, 1
    %p54 = por %p52, %p53
    %p55 = scmp.ne.s32.totalorder %s46, %s47
    %p56 = scmp.eq.s32.totalorder %s15, 0
    %p57 = por %p55, %p56
    %p58 = scmp.ne.s32.totalorder %s46, %s47
    %p59 = scmp.eq.s32.totalorder %s16, 1
    %p60 = por %p58, %p59
    %p62 = scmp.ne.s32.totalorder %s47, %s61
    %p63 = scmp.eq.s32.totalorder %s16, 0
    %p64 = por %p62, %p63
    %s66 = sadd.s32 %s65, 1
    %p69 = scmp.eq.s32.totalorder %s10, 1
    %p70 = scmp.ne.s32.totalorder %s65, %s67
    %p71 = scmp.eq.s32.totalorder %s10, 0
    %p72 = por %p70, %p71
    %p73 = scmp.ne.s32.totalorder %s65, %s67
    %p74 = scmp.eq.s32.totalorder %s15, 1
    %p75 = por %p73, %p74
    %p76 = scmp.ne.s32.totalorder %s67, %s68
    %p77 = scmp.eq.s32.totalorder %s15, 0
    %p78 = por %p76, %p77
    %p79 = scmp.ne.s32.totalorder %s67, %s68
    %p80 = scmp.eq.s32.totalorder %s16, 1
    %p81 = por %p79, %p80
    %p83 = scmp.ne.s32.totalorder %s68, %s82
    %p84 = scmp.eq.s32.totalorder %s16, 0
    %p85 = por %p83, %p84
    %s86 = ssub.s32 %s10, %s17
    %p87 = scmp.eq.s32.totalorder %s86, 0
    %s89 = sadd.s32 %s88, 1
    %s90 = scalar_select %p87, %s88, %s89
    %p93 = pneg %p87
    %p94 = scmp.eq.s32.totalorder %s10, 1
    %p95 = por %p93, %p94
    %p96 = scmp.ne.s32.totalorder %s88, %s91
    %p97 = scmp.eq.s32.totalorder %s10, 0
    %p98 = por %p96, %p97
    %p99 = scmp.ne.s32.totalorder %s88, %s91
    %p100 = scmp.eq.s32.totalorder %s15, 1
    %p101 = por %p99, %p100
    %p102 = scmp.ne.s32.totalorder %s91, %s92
    %p103 = scmp.eq.s32.totalorder %s15, 0
    %p104 = por %p102, %p103
    %p105 = scmp.ne.s32.totalorder %s91, %s92
    %p106 = scmp.eq.s32.totalorder %s16, 1
    %p107 = por %p105, %p106
    %p109 = scmp.ne.s32.totalorder %s92, %s108
    %p110 = scmp.eq.s32.totalorder %s16, 0
    %p111 = por %p109, %p110
    %s112 = ssub.s32 %s10, %s17
    %p113 = scmp.eq.s32.totalorder %s112, 0
    %s115 = sadd.s32 %s114, 1
    %s116 = scalar_select %p113, %s114, %s115
    %p119 = pneg %p113
    %p120 = scmp.eq.s32.totalorder %s10, 1
    %p121 = por %p119, %p120
    %p122 = scmp.ne.s32.totalorder %s114, %s117
    %p123 = scmp.eq.s32.totalorder %s10, 0
    %p124 = por %p122, %p123
    %p125 = scmp.ne.s32.totalorder %s114, %s117
    %p126 = scmp.eq.s32.totalorder %s15, 1
    %p127 = por %p125, %p126
    %p128 = scmp.ne.s32.totalorder %s117, %s118
    %p129 = scmp.eq.s32.totalorder %s15, 0
    %p130 = por %p128, %p129
    %p131 = scmp.ne.s32.totalorder %s117, %s118
    %p132 = scmp.eq.s32.totalorder %s16, 1
    %p133 = por %p131, %p132
    %p135 = scmp.ne.s32.totalorder %s118, %s134
    %p136 = scmp.eq.s32.totalorder %s16, 0
    %p137 = por %p135, %p136
    %p138 = scmp.le.s32.totalorder 1, %s10
    %p139 = scmp.lt.s32.totalorder %s10, 3
    %p140 = pnand %p138, %p139
    %p141 = pneg %p140
    // Predicated region
    $region9: #{hwnn_layer_forward.2} parent=5 // pred_check
      _
    $region10: #{hwnn_layer_forward.2} parent=5 // pred_check_branch
      %143 = sbr.rel (%p140) target = $region12
    $region11: #{hwnn_layer_forward.2} parent=5 // pred_region
      %s144 = ssub.s32 %s10, 1
      // Predicated region
      $region13: #{hwnn_layer_forward.2} parent=11 // pred_check
        %p145 = pneg %p57
      $region14: #{hwnn_layer_forward.2} parent=11 // pred_check_branch
        %147 = sbr.rel (%p145) target = $region16
      $region15: #{hwnn_layer_forward.2} parent=11 // pred_region
        _
      $region16: #{hwnn_layer_forward.2} parent=11 // pred_fallthru
        _
      // Predicated region
      $region17: #{hwnn_layer_forward.2} parent=11 // pred_check
        %p148 = pneg %p78
      $region18: #{hwnn_layer_forward.2} parent=11 // pred_check_branch
        %150 = sbr.rel (%p148) target = $region20
      $region19: #{hwnn_layer_forward.2} parent=11 // pred_region
        _
      $region20: #{hwnn_layer_forward.2} parent=11 // pred_fallthru
        _
    $region12: #{hwnn_layer_forward.2} parent=5 // pred_fallthru
      _
    %p151 = scmp.lt.s32.totalorder %s10, 2
    // Predicated region
    $region21: #{hwnn_layer_forward.2} parent=5 // pred_check
      %p152 = pneg %p151
    $region22: #{hwnn_layer_forward.2} parent=5 // pred_check_branch
      %154 = sbr.rel (%p152) target = $region24
    $region23: #{hwnn_layer_forward.2} parent=5 // pred_region
      // Predicated region
      $region25: #{hwnn_layer_forward.2} parent=23 // pred_check
        %p155 = pneg %p30
      $region26: #{hwnn_layer_forward.2} parent=23 // pred_check_branch
        %157 = sbr.rel (%p155) target = $region28
      $region27: #{hwnn_layer_forward.2} parent=23 // pred_region
        %s158 = smul.u32 24, %s10
        %p159 = scmp.lt.s32.totalorder %s158, 47
        %s160 = scalar_select %p159, %s158, 47
        %s161 = smul.addr %s160, 3
        %s162 = smul.addr %s161, 4
        %s163 = scalar_lea.vmem %s0, %s162
        %s164 = smul.u32 24, %s10
      $region28: #{hwnn_layer_forward.2} parent=23 // pred_fallthru
        _
      // Predicated region
      $region29: #{hwnn_layer_forward.2} parent=23 // pred_check
        %p165 = pneg %p98
      $region30: #{hwnn_layer_forward.2} parent=23 // pred_check_branch
        %167 = sbr.rel (%p165) target = $region32
      $region31: #{hwnn_layer_forward.2} parent=23 // pred_region
        %s168 = smul.u32 24, %s10
        %p169 = scmp.lt.s32.totalorder %s168, 47
        %s170 = scalar_select %p169, %s168, 47
        %s171 = smul.addr %s170, 8
        %s172 = scalar_lea.vmem %s3, %s171
        %s173 = smul.u32 24, %s10
      $region32: #{hwnn_layer_forward.2} parent=23 // pred_fallthru
        _
    $region24: #{hwnn_layer_forward.2} parent=5 // pred_fallthru
      _
    %p174 = scmp.le.s32.totalorder 1, %s10
    %p175 = scmp.lt.s32.totalorder %s10, 3
    %p176 = pnand %p174, %p175
    %p177 = pneg %p176
    // Predicated region
    $region33: #{hwnn_layer_forward.2} parent=5 // pred_check
      _
    $region34: #{hwnn_layer_forward.2} parent=5 // pred_check_branch
      %179 = sbr.rel (%p176) target = $region36
    $region35: #{hwnn_layer_forward.2} parent=5 // pred_region
      %s180 = ssub.s32 %s10, 1
      %s181 = smul.u32 24, %s15
      %p182 = scmp.lt.s32.totalorder %s181, 47
      %s183 = scalar_select %p182, %s181, 47
      %s184 = smul.addr %s183, 3
      %s185 = smul.addr %s184, 4
      %s186 = scalar_lea.vmem %s0, %s185
      %p187 = pneg %p36
      %p188 = pneg %p33
      %p189 = pneg %p57
      %p190 = pneg %p54
      %p191 = pneg %p78
      %p192 = pneg %p75
      %s193 = smul.u32 24, %s15
      %p194 = scmp.lt.s32.totalorder %s193, 47
      %s195 = scalar_select %p194, %s193, 47
      %s196 = smul.addr %s195, 8
      %s197 = scalar_lea.vmem %s3, %s196
      %p198 = pneg %p104
      %p199 = pneg %p101
      %p200 = pneg %p130
      %p201 = pneg %p127
      %s202 = smul.u32 24, %s15
      %p203 = scmp.lt.s32.totalorder %s202, 47
      %s204 = scalar_select %p203, %s202, 47
      %s205 = smul.addr %s204, 4
      %s206 = scalar_lea.vmem %s4, %s205
      %s207 = smul.u32 24, %s15
      %p208 = scmp.lt.s32.totalorder %s207, 47
      %s209 = scalar_select %p208, %s207, 47
      %s210 = smul.addr %s209, 3
      %s211 = smul.addr %s210, 4
      %s212 = scalar_lea.vmem %s0, %s211
      %s213 = smul.u32 24, %s15
      %s214 = smul.u32 24, %s15
      %p215 = scmp.lt.s32.totalorder %s214, 47
      %s216 = scalar_select %p215, %s214, 47
      %s217 = smul.addr %s216, 8
      %s218 = scalar_lea.vmem %s3, %s217
      %s219 = smul.u32 24, %s15
      %s220 = smul.u32 24, %s15
      %p221 = scmp.lt.s32.totalorder %s220, 47
      %s222 = scalar_select %p221, %s220, 47
      %s223 = smul.addr %s222, 4
      %s224 = scalar_lea.vmem %s4, %s223
      %s225 = smul.u32 24, %s15
      %v227 = vld [vmem:[%s1] sm:$0xf]
      %v228 = vld [vmem:[%s1 + $0x4] sm:$0xf]
      %v229 = vld [vmem:[%s1 + $0x8] sm:$0xf]
      %v230 = vld [vmem:[%s1 + $0xc] sm:$0xf]
      %v231 = vld [vmem:[%s1 + $0x10] sm:$0xf]
      %v232 = vld [vmem:[%s1 + $0x14] sm:$0xf]
      %v233 = vld [vmem:[%s1 + $0x18] sm:$0xf]
      %v234 = vld [vmem:[%s1 + $0x1c] sm:$0xf]
      %v235 = vld [vmem:[%s1 + $0x20] sm:$0xf]
      %v236 = vld [vmem:[%s1 + $0x24] sm:$0xf]
      %v237 = vld [vmem:[%s1 + $0x28] sm:$0xf]
      %v238 = vld [vmem:[%s1 + $0x2c] sm:$0xf]
      %v239 = vld [vmem:[%s1 + $0x30] sm:$0xf]
      %v240 = vld [vmem:[%s1 + $0x34] sm:$0xf]
      %v241 = vld [vmem:[%s1 + $0x38] sm:$0xf]
      %v242 = vld [vmem:[%s1 + $0x3c] sm:$0xf]
      %v243 = vld [vmem:[%s1 + $0x40] sm:$0xf]
      %v244 = vld [vmem:[%s1 + $0x44] sm:$0xf]
      %v245 = vld [vmem:[%s1 + $0x48] sm:$0xf]
      %v246 = vld [vmem:[%s1 + $0x4c] sm:$0xf]
      %v247 = vld [vmem:[%s1 + $0x50] sm:$0xf]
      %v248 = vld [vmem:[%s1 + $0x54] sm:$0xf]
      %v249 = vld [vmem:[%s1 + $0x58] sm:$0xf]
      %v250 = vld [vmem:[%s1 + $0x5c] sm:$0xf]
      %v251 = vld [vmem:[%s1 + $0x60] sm:$0xf]
      %v252 = vld [vmem:[%s1 + $0x64] sm:$0xf]
      %v253 = vld [vmem:[%s1 + $0x68] sm:$0xf]
      %v254 = vld [vmem:[%s1 + $0x6c] sm:$0xf]
      %v255 = vld [vmem:[%s1 + $0x70] sm:$0xf]
      %v256 = vld [vmem:[%s1 + $0x74] sm:$0xf]
      %v257 = vld [vmem:[%s1 + $0x78] sm:$0xf]
      %v258 = vld [vmem:[%s1 + $0x7c] sm:$0xf]
      %v259 = vld [vmem:[%s1 + $0x80] sm:$0xf]
      %v260 = vld [vmem:[%s1 + $0x84] sm:$0xf]
      %v261 = vld [vmem:[%s1 + $0x88] sm:$0xf]
      %v262 = vld [vmem:[%s1 + $0x8c] sm:$0xf]
      %v263 = vld [vmem:[%s1 + $0x90] sm:$0xf]
      %v264 = vld [vmem:[%s1 + $0x94] sm:$0xf]
      %v265 = vld [vmem:[%s1 + $0x98] sm:$0xf]
      %v266 = vld [vmem:[%s1 + $0x9c] sm:$0xf]
      %v267 = vld [vmem:[%s1 + $0xa0] sm:$0xf]
      %v268 = vld [vmem:[%s1 + $0xa4] sm:$0xf]
      %v269 = vld [vmem:[%s1 + $0xa8] sm:$0xf]
      %v270 = vld [vmem:[%s1 + $0xac] sm:$0xf]
      %v271 = vld [vmem:[%s1 + $0xb0] sm:$0xf]
      %v272 = vld [vmem:[%s1 + $0xb4] sm:$0xf]
      %v273 = vld [vmem:[%s1 + $0xb8] sm:$0xf]
      %v274 = vld [vmem:[%s1 + $0xbc] sm:$0xf]
      %v275 = vld [vmem:[%s2] sm:$0xf]
      %v276 = vld [vmem:[%s2 + $0x4] sm:$0xf]
      %v277 = vld [vmem:[%s2 + $0x8] sm:$0xf]
      %v278 = vld [vmem:[%s2 + $0xc] sm:$0xf]
      %v279 = vld [vmem:[%s2 + $0x10] sm:$0xf]
      %v280 = vld [vmem:[%s2 + $0x14] sm:$0xf]
      %v281 = vld [vmem:[%s2 + $0x18] sm:$0xf]
      %v282 = vld [vmem:[%s2 + $0x1c] sm:$0xf]
      %v283 = vld [vmem:[%s2 + $0x20] sm:$0xf]
      %v284 = vld [vmem:[%s2 + $0x24] sm:$0xf]
      %v285 = vld [vmem:[%s2 + $0x28] sm:$0xf]
      %v286 = vld [vmem:[%s2 + $0x2c] sm:$0xf]
      %v287 = vld [vmem:[%s2 + $0x30] sm:$0xf]
      %v288 = vld [vmem:[%s2 + $0x34] sm:$0xf]
      %v289 = vld [vmem:[%s2 + $0x38] sm:$0xf]
      %v290 = vld [vmem:[%s2 + $0x3c] sm:$0xf]
      %v339 = vunpack.c.l.b16 %v227
      %v340 = vunpack.c.l.b16 %v228
      %v341 = vunpack.c.l.b16 %v229
      %v342 = vunpack.c.l.b16 %v230
      %v343 = vunpack.c.l.b16 %v231
      %v344 = vunpack.c.l.b16 %v232
      %v345 = vunpack.c.l.b16 %v233
      %v346 = vunpack.c.l.b16 %v234
      %v347 = vunpack.c.l.b16 %v235
      %v348 = vunpack.c.l.b16 %v236
      %v349 = vunpack.c.l.b16 %v237
      %v350 = vunpack.c.l.b16 %v238
      %v351 = vunpack.c.l.b16 %v239
      %v352 = vunpack.c.l.b16 %v240
      %v353 = vunpack.c.l.b16 %v241
      %v354 = vunpack.c.l.b16 %v242
      %v355 = vunpack.c.l.b16 %v243
      %v356 = vunpack.c.l.b16 %v244
      %v357 = vunpack.c.l.b16 %v245
      %v358 = vunpack.c.l.b16 %v246
      %v359 = vunpack.c.l.b16 %v247
      %v360 = vunpack.c.l.b16 %v248
      %v361 = vunpack.c.l.b16 %v249
      %v362 = vunpack.c.l.b16 %v250
      %v363 = vunpack.c.l.b16 %v251
      %v364 = vunpack.c.l.b16 %v252
      %v365 = vunpack.c.l.b16 %v253
      %v366 = vunpack.c.l.b16 %v254
      %v367 = vunpack.c.l.b16 %v255
      %v368 = vunpack.c.l.b16 %v256
      %v369 = vunpack.c.l.b16 %v257
      %v370 = vunpack.c.l.b16 %v258
      %v371 = vunpack.c.l.b16 %v259
      %v372 = vunpack.c.l.b16 %v260
      %v373 = vunpack.c.l.b16 %v261
      %v374 = vunpack.c.l.b16 %v262
      %v375 = vunpack.c.l.b16 %v263
      %v376 = vunpack.c.l.b16 %v264
      %v377 = vunpack.c.l.b16 %v265
      %v378 = vunpack.c.l.b16 %v266
      %v379 = vunpack.c.l.b16 %v267
      %v380 = vunpack.c.l.b16 %v268
      %v381 = vunpack.c.l.b16 %v269
      %v382 = vunpack.c.l.b16 %v270
      %v383 = vunpack.c.l.b16 %v271
      %v384 = vunpack.c.l.b16 %v272
      %v385 = vunpack.c.l.b16 %v273
      %v386 = vunpack.c.l.b16 %v274
      %v387 = vpack.c.b16 %v340, %v339
      %v388 = vpack.c.b16 %v342, %v341
      %v389 = vpack.c.b16 %v344, %v343
      %v390 = vpack.c.b16 %v346, %v345
      %v391 = vpack.c.b16 %v348, %v347
      %v392 = vpack.c.b16 %v350, %v349
      %v393 = vpack.c.b16 %v352, %v351
      %v394 = vpack.c.b16 %v354, %v353
      %v395 = vpack.c.b16 %v356, %v355
      %v396 = vpack.c.b16 %v358, %v357
      %v397 = vpack.c.b16 %v360, %v359
      %v398 = vpack.c.b16 %v362, %v361
      %v399 = vpack.c.b16 %v364, %v363
      %v400 = vpack.c.b16 %v366, %v365
      %v401 = vpack.c.b16 %v368, %v367
      %v402 = vpack.c.b16 %v370, %v369
      %v403 = vpack.c.b16 %v372, %v371
      %v404 = vpack.c.b16 %v374, %v373
      %v405 = vpack.c.b16 %v376, %v375
      %v406 = vpack.c.b16 %v378, %v377
      %v407 = vpack.c.b16 %v380, %v379
      %v408 = vpack.c.b16 %v382, %v381
      %v409 = vpack.c.b16 %v384, %v383
      %v410 = vpack.c.b16 %v386, %v385
      %v451 = vunpack.c.l.b16 %v275
      %v452 = vunpack.c.l.b16 %v276
      %v453 = vunpack.c.l.b16 %v277
      %v454 = vunpack.c.l.b16 %v278
      %v455 = vunpack.c.l.b16 %v279
      %v456 = vunpack.c.l.b16 %v280
      %v457 = vunpack.c.l.b16 %v281
      %v458 = vunpack.c.l.b16 %v282
      %v459 = vunpack.c.l.b16 %v283
      %v460 = vunpack.c.l.b16 %v284
      %v461 = vunpack.c.l.b16 %v285
      %v462 = vunpack.c.l.b16 %v286
      %v463 = vunpack.c.l.b16 %v287
      %v464 = vunpack.c.l.b16 %v288
      %v465 = vunpack.c.l.b16 %v289
      %v466 = vunpack.c.l.b16 %v290
      %v467 = vpack.c.b16 %v452, %v451
      %v468 = vpack.c.b16 %v454, %v453
      %v469 = vpack.c.b16 %v456, %v455
      %v470 = vpack.c.b16 %v458, %v457
      %v471 = vpack.c.b16 %v460, %v459
      %v472 = vpack.c.b16 %v462, %v461
      %v473 = vpack.c.b16 %v464, %v463
      %v474 = vpack.c.b16 %v466, %v465
      %483 = vmatprep.subr.bf16.mxu0 0
      %484 = vmatpush1.bf16.msra.mxu0 %v467
      %485 = vmatprep.subr.bf16.mxu0 0
      %486 = vmatpush1.bf16.msra.mxu0 %v468
      %487 = vmatprep.subr.bf16.mxu0 0
      %488 = vmatpush1.bf16.msra.mxu0 %v469
      %489 = vmatprep.subr.bf16.mxu0 0
      %490 = vmatpush1.bf16.msra.mxu0 %v470
      %491 = vmatprep.subr.bf16.mxu0 0
      %492 = vmatpush1.bf16.msra.mxu0 %v471
      %493 = vmatprep.subr.bf16.mxu0 0
      %494 = vmatpush1.bf16.msra.mxu0 %v472
      %495 = vmatprep.subr.bf16.mxu0 0
      %496 = vmatpush1.bf16.msra.mxu0 %v473
      %497 = vmatprep.subr.bf16.mxu0 0
      %498 = vmatpush1.bf16.msra.mxu0 %v474
      %499 = vmatprep.subr.bf16.mxu0 0
      %500 = vmatpush1.bf16.msra.mxu0 0
      %501 = vmatprep.subr.bf16.mxu0 0
      %502 = vmatpush1.bf16.msra.mxu0 0
      %503 = vmatprep.subr.bf16.mxu0 0
      %504 = vmatpush1.bf16.msra.mxu0 0
      %505 = vmatprep.subr.bf16.mxu0 0
      %506 = vmatpush1.bf16.msra.mxu0 0
      %507 = vmatprep.subr.bf16.mxu0 0
      %508 = vmatpush1.bf16.msra.mxu0 0
      %509 = vmatprep.subr.bf16.mxu0 0
      %510 = vmatpush1.bf16.msra.mxu0 0
      %511 = vmatprep.subr.bf16.mxu0 0
      %512 = vmatpush1.bf16.msra.mxu0 0
      %513 = vmatprep.subr.bf16.mxu0 0
      %514 = vmatpush1.bf16.msra.mxu0 0
      %515 = vmatprep.mubr.bf16.mxu0 0
      %516 = vmatmul.mubr.bf16.gmra.mrb[0].mxu0 %v387
      %v517 = vpop.f32.mrb[0].mxu0
      %v518 = vadd.f32 0.0, %v517
      %v519 = vpop.f32.mrb[0].mxu0
      %v520 = vpop.f32.mrb[0].mxu0
      %v521 = vadd.f32 0.0, %v520
      %v522 = vpop.f32.mrb[0].mxu0
      %523 = vmatprep.mubr.bf16.mxu0 0
      %524 = vmatmul.mubr.bf16.gmra.mrb[0].mxu0 %v388
      %v525 = vpop.f32.mrb[0].mxu0
      %v526 = vadd.f32 0.0, %v525
      %v527 = vpop.f32.mrb[0].mxu0
      %v528 = vpop.f32.mrb[0].mxu0
      %v529 = vadd.f32 0.0, %v528
      %v530 = vpop.f32.mrb[0].mxu0
      %531 = vmatprep.mubr.bf16.mxu0 0
      %532 = vmatmul.mubr.bf16.gmra.mrb[0].mxu0 %v389
      %v533 = vpop.f32.mrb[0].mxu0
      %v534 = vadd.f32 0.0, %v533
      %v535 = vpop.f32.mrb[0].mxu0
      %v536 = vpop.f32.mrb[0].mxu0
      %v537 = vadd.f32 0.0, %v536
      %v538 = vpop.f32.mrb[0].mxu0
      %539 = vmatprep.mubr.bf16.mxu0 0
      %540 = vmatmul.mubr.bf16.gmra.mrb[0].mxu0 %v390
      %v541 = vpop.f32.mrb[0].mxu0
      %v542 = vadd.f32 0.0, %v541
      %v543 = vpop.f32.mrb[0].mxu0
      %v544 = vpop.f32.mrb[0].mxu0
      %v545 = vadd.f32 0.0, %v544
      %v546 = vpop.f32.mrb[0].mxu0
      %547 = vmatprep.mubr.bf16.mxu0 0
      %548 = vmatmul.mubr.bf16.gmra.mrb[0].mxu0 %v391
      %v549 = vpop.f32.mrb[0].mxu0
      %v550 = vadd.f32 0.0, %v549
      %v551 = vpop.f32.mrb[0].mxu0
      %v552 = vpop.f32.mrb[0].mxu0
      %v553 = vadd.f32 0.0, %v552
      %v554 = vpop.f32.mrb[0].mxu0
      %555 = vmatprep.mubr.bf16.mxu0 0
      %556 = vmatmul.mubr.bf16.gmra.mrb[0].mxu0 %v392
      %v557 = vpop.f32.mrb[0].mxu0
      %v558 = vadd.f32 0.0, %v557
      %v559 = vpop.f32.mrb[0].mxu0
      %v560 = vpop.f32.mrb[0].mxu0
      %v561 = vadd.f32 0.0, %v560
      %v562 = vpop.f32.mrb[0].mxu0
      %563 = vmatprep.mubr.bf16.mxu0 0
      %564 = vmatmul.mubr.bf16.gmra.mrb[0].mxu0 %v393
      %v565 = vpop.f32.mrb[0].mxu0
      %v566 = vadd.f32 0.0, %v565
      %v567 = vpop.f32.mrb[0].mxu0
      %v568 = vpop.f32.mrb[0].mxu0
      %v569 = vadd.f32 0.0, %v568
      %v570 = vpop.f32.mrb[0].mxu0
      %571 = vmatprep.mubr.bf16.mxu0 0
      %572 = vmatmul.mubr.bf16.gmra.mrb[0].mxu0 %v394
      %v573 = vpop.f32.mrb[0].mxu0
      %v574 = vadd.f32 0.0, %v573
      %v575 = vpop.f32.mrb[0].mxu0
      %v576 = vpop.f32.mrb[0].mxu0
      %v577 = vadd.f32 0.0, %v576
      %v578 = vpop.f32.mrb[0].mxu0
      %579 = vmatprep.mubr.bf16.mxu0 0
      %580 = vmatmul.mubr.bf16.gmra.mrb[0].mxu0 %v395
      %v581 = vpop.f32.mrb[0].mxu0
      %v582 = vadd.f32 0.0, %v581
      %v583 = vpop.f32.mrb[0].mxu0
      %v584 = vpop.f32.mrb[0].mxu0
      %v585 = vadd.f32 0.0, %v584
      %v586 = vpop.f32.mrb[0].mxu0
      %587 = vmatprep.mubr.bf16.mxu0 0
      %588 = vmatmul.mubr.bf16.gmra.mrb[0].mxu0 %v396
      %v589 = vpop.f32.mrb[0].mxu0
      %v590 = vadd.f32 0.0, %v589
      %v591 = vpop.f32.mrb[0].mxu0
      %v592 = vpop.f32.mrb[0].mxu0
      %v593 = vadd.f32 0.0, %v592
      %v594 = vpop.f32.mrb[0].mxu0
      %595 = vmatprep.mubr.bf16.mxu0 0
      %596 = vmatmul.mubr.bf16.gmra.mrb[0].mxu0 %v397
      %v597 = vpop.f32.mrb[0].mxu0
      %v598 = vadd.f32 0.0, %v597
      %v599 = vpop.f32.mrb[0].mxu0
      %v600 = vpop.f32.mrb[0].mxu0
      %v601 = vadd.f32 0.0, %v600
      %v602 = vpop.f32.mrb[0].mxu0
      %603 = vmatprep.mubr.bf16.mxu0 0
      %604 = vmatmul.mubr.bf16.gmra.mrb[0].mxu0 %v398
      %v605 = vpop.f32.mrb[0].mxu0
      %v606 = vadd.f32 0.0, %v605
      %v607 = vpop.f32.mrb[0].mxu0
      %v608 = vpop.f32.mrb[0].mxu0
      %v609 = vadd.f32 0.0, %v608
      %v610 = vpop.f32.mrb[0].mxu0
      %611 = vmatprep.mubr.bf16.mxu0 0
      %612 = vmatmul.mubr.bf16.gmra.mrb[0].mxu0 %v399
      %v613 = vpop.f32.mrb[0].mxu0
      %v614 = vadd.f32 0.0, %v613
      %v615 = vpop.f32.mrb[0].mxu0
      %v616 = vpop.f32.mrb[0].mxu0
      %v617 = vadd.f32 0.0, %v616
      %v618 = vpop.f32.mrb[0].mxu0
      %619 = vmatprep.mubr.bf16.mxu0 0
      %620 = vmatmul.mubr.bf16.gmra.mrb[0].mxu0 %v400
      %v621 = vpop.f32.mrb[0].mxu0
      %v622 = vadd.f32 0.0, %v621
      %v623 = vpop.f32.mrb[0].mxu0
      %v624 = vpop.f32.mrb[0].mxu0
      %v625 = vadd.f32 0.0, %v624
      %v626 = vpop.f32.mrb[0].mxu0
      %627 = vmatprep.mubr.bf16.mxu0 0
      %628 = vmatmul.mubr.bf16.gmra.mrb[0].mxu0 %v401
      %v629 = vpop.f32.mrb[0].mxu0
      %v630 = vadd.f32 0.0, %v629
      %v631 = vpop.f32.mrb[0].mxu0
      %v632 = vpop.f32.mrb[0].mxu0
      %v633 = vadd.f32 0.0, %v632
      %v634 = vpop.f32.mrb[0].mxu0
      %635 = vmatprep.mubr.bf16.mxu0 0
      %636 = vmatmul.mubr.bf16.gmra.mrb[0].mxu0 %v402
      %v637 = vpop.f32.mrb[0].mxu0
      %v638 = vadd.f32 0.0, %v637
      %v639 = vpop.f32.mrb[0].mxu0
      %v640 = vpop.f32.mrb[0].mxu0
      %v641 = vadd.f32 0.0, %v640
      %v642 = vpop.f32.mrb[0].mxu0
      %643 = vmatprep.mubr.bf16.mxu0 0
      %644 = vmatmul.mubr.bf16.gmra.mrb[0].mxu0 %v403
      %v645 = vpop.f32.mrb[0].mxu0
      %v646 = vadd.f32 0.0, %v645
      %v647 = vpop.f32.mrb[0].mxu0
      %v648 = vpop.f32.mrb[0].mxu0
      %v649 = vadd.f32 0.0, %v648
      %v650 = vpop.f32.mrb[0].mxu0
      %651 = vmatprep.mubr.bf16.mxu0 0
      %652 = vmatmul.mubr.bf16.gmra.mrb[0].mxu0 %v404
      %v653 = vpop.f32.mrb[0].mxu0
      %v654 = vadd.f32 0.0, %v653
      %v655 = vpop.f32.mrb[0].mxu0
      %v656 = vpop.f32.mrb[0].mxu0
      %v657 = vadd.f32 0.0, %v656
      %v658 = vpop.f32.mrb[0].mxu0
      %659 = vmatprep.mubr.bf16.mxu0 0
      %660 = vmatmul.mubr.bf16.gmra.mrb[0].mxu0 %v405
      %v661 = vpop.f32.mrb[0].mxu0
      %v662 = vadd.f32 0.0, %v661
      %v663 = vpop.f32.mrb[0].mxu0
      %v664 = vpop.f32.mrb[0].mxu0
      %v665 = vadd.f32 0.0, %v664
      %v666 = vpop.f32.mrb[0].mxu0
      %667 = vmatprep.mubr.bf16.mxu0 0
      %668 = vmatmul.mubr.bf16.gmra.mrb[0].mxu0 %v406
      %v669 = vpop.f32.mrb[0].mxu0
      %v670 = vadd.f32 0.0, %v669
      %v671 = vpop.f32.mrb[0].mxu0
      %v672 = vpop.f32.mrb[0].mxu0
      %v673 = vadd.f32 0.0, %v672
      %v674 = vpop.f32.mrb[0].mxu0
      %675 = vmatprep.mubr.bf16.mxu0 0
      %676 = vmatmul.mubr.bf16.gmra.mrb[0].mxu0 %v407
      %v677 = vpop.f32.mrb[0].mxu0
      %v678 = vadd.f32 0.0, %v677
      %v679 = vpop.f32.mrb[0].mxu0
      %v680 = vpop.f32.mrb[0].mxu0
      %v681 = vadd.f32 0.0, %v680
      %v682 = vpop.f32.mrb[0].mxu0
      %683 = vmatprep.mubr.bf16.mxu0 0
      %684 = vmatmul.mubr.bf16.gmra.mrb[0].mxu0 %v408
      %v685 = vpop.f32.mrb[0].mxu0
      %v686 = vadd.f32 0.0, %v685
      %v687 = vpop.f32.mrb[0].mxu0
      %v688 = vpop.f32.mrb[0].mxu0
      %v689 = vadd.f32 0.0, %v688
      %v690 = vpop.f32.mrb[0].mxu0
      %691 = vmatprep.mubr.bf16.mxu0 0
      %692 = vmatmul.mubr.bf16.gmra.mrb[0].mxu0 %v409
      %v693 = vpop.f32.mrb[0].mxu0
      %v694 = vadd.f32 0.0, %v693
      %v695 = vpop.f32.mrb[0].mxu0
      %v696 = vpop.f32.mrb[0].mxu0
      %v697 = vadd.f32 0.0, %v696
      %v698 = vpop.f32.mrb[0].mxu0
      %699 = vmatprep.mubr.bf16.mxu0 0
      %700 = vmatmul.mubr.bf16.gmra.mrb[0].mxu0 %v410
      %v701 = vpop.f32.mrb[0].mxu0
      %v702 = vadd.f32 0.0, %v701
      %v703 = vpop.f32.mrb[0].mxu0
      %v704 = vpop.f32.mrb[0].mxu0
      %v705 = vadd.f32 0.0, %v704
      %v706 = vpop.f32.mrb[0].mxu0
      %707 = vdwg.mxu0
      %v708 = vpack.c.bf16 %v521, %v518
      %v709 = vpack.c.bf16 %v529, %v526
      %v710 = vpack.c.bf16 %v537, %v534
      %v711 = vpack.c.bf16 %v545, %v542
      %v712 = vpack.c.bf16 %v553, %v550
      %v713 = vpack.c.bf16 %v561, %v558
      %v714 = vpack.c.bf16 %v569, %v566
      %v715 = vpack.c.bf16 %v577, %v574
      %v716 = vpack.c.bf16 %v585, %v582
      %v717 = vpack.c.bf16 %v593, %v590
      %v718 = vpack.c.bf16 %v601, %v598
      %v719 = vpack.c.bf16 %v609, %v606
      %v720 = vpack.c.bf16 %v617, %v614
      %v721 = vpack.c.bf16 %v625, %v622
      %v722 = vpack.c.bf16 %v633, %v630
      %v723 = vpack.c.bf16 %v641, %v638
      %v724 = vpack.c.bf16 %v649, %v646
      %v725 = vpack.c.bf16 %v657, %v654
      %v726 = vpack.c.bf16 %v665, %v662
      %v727 = vpack.c.bf16 %v673, %v670
      %v728 = vpack.c.bf16 %v681, %v678
      %v729 = vpack.c.bf16 %v689, %v686
      %v730 = vpack.c.bf16 %v697, %v694
      %v731 = vpack.c.bf16 %v705, %v702
      %v732 = vld [vmem:[%s212] sm:$0xff]
      %v733 = vld [vmem:[%s212 + $0x8] sm:$0xf]
      %v734 = vld [vmem:[%s212 + $0xc] sm:$0xff]
      %v735 = vld [vmem:[%s212 + $0x14] sm:$0xf]
      %v736 = vld [vmem:[%s212 + $0x18] sm:$0xff]
      %v737 = vld [vmem:[%s212 + $0x20] sm:$0xf]
      %v738 = vld [vmem:[%s212 + $0x24] sm:$0xff]
      %v739 = vld [vmem:[%s212 + $0x2c] sm:$0xf]
      %v740 = vld [vmem:[%s212 + $0x30] sm:$0xff]
      %v741 = vld [vmem:[%s212 + $0x38] sm:$0xf]
      %v742 = vld [vmem:[%s212 + $0x3c] sm:$0xff]
      %v743 = vld [vmem:[%s212 + $0x44] sm:$0xf]
      %v744 = vld [vmem:[%s212 + $0x48] sm:$0xff]
      %v745 = vld [vmem:[%s212 + $0x50] sm:$0xf]
      %v746 = vld [vmem:[%s212 + $0x54] sm:$0xff]
      %v747 = vld [vmem:[%s212 + $0x5c] sm:$0xf]
      %v748 = vld [vmem:[%s212 + $0x60] sm:$0xff]
      %v749 = vld [vmem:[%s212 + $0x68] sm:$0xf]
      %v750 = vld [vmem:[%s212 + $0x6c] sm:$0xff]
      %v751 = vld [vmem:[%s212 + $0x74] sm:$0xf]
      %v752 = vld [vmem:[%s212 + $0x78] sm:$0xff]
      %v753 = vld [vmem:[%s212 + $0x80] sm:$0xf]
      %v754 = vld [vmem:[%s212 + $0x84] sm:$0xff]
      %v755 = vld [vmem:[%s212 + $0x8c] sm:$0xf]
      %v756 = vld [vmem:[%s212 + $0x90] sm:$0xff]
      %v757 = vld [vmem:[%s212 + $0x98] sm:$0xf]
      %v758 = vld [vmem:[%s212 + $0x9c] sm:$0xff]
      %v759 = vld [vmem:[%s212 + $0xa4] sm:$0xf]
      %v760 = vld [vmem:[%s212 + $0xa8] sm:$0xff]
      %v761 = vld [vmem:[%s212 + $0xb0] sm:$0xf]
      %v762 = vld [vmem:[%s212 + $0xb4] sm:$0xff]
      %v763 = vld [vmem:[%s212 + $0xbc] sm:$0xf]
      %v764 = vld [vmem:[%s212 + $0xc0] sm:$0xff]
      %v765 = vld [vmem:[%s212 + $0xc8] sm:$0xf]
      %v766 = vld [vmem:[%s212 + $0xcc] sm:$0xff]
      %v767 = vld [vmem:[%s212 + $0xd4] sm:$0xf]
      %v768 = vld [vmem:[%s212 + $0xd8] sm:$0xff]
      %v769 = vld [vmem:[%s212 + $0xe0] sm:$0xf]
      %v770 = vld [vmem:[%s212 + $0xe4] sm:$0xff]
      %v771 = vld [vmem:[%s212 + $0xec] sm:$0xf]
      %v772 = vld [vmem:[%s212 + $0xf0] sm:$0xff]
      %v773 = vld [vmem:[%s212 + $0xf8] sm:$0xf]
      %v774 = vld [vmem:[%s212 + $0xfc] sm:$0xff]
      %v775 = vld [vmem:[%s212 + $0x104] sm:$0xf]
      %v776 = vld [vmem:[%s212 + $0x108] sm:$0xff]
      %v777 = vld [vmem:[%s212 + $0x110] sm:$0xf]
      %v778 = vld [vmem:[%s212 + $0x114] sm:$0xff]
      %v779 = vld [vmem:[%s212 + $0x11c] sm:$0xf]
      %v828 = vunpack.c.l.b16 %v732
      %v829 = vunpack.c.h.b16 %v732
      %v830 = vunpack.c.l.b16 %v733
      %v831 = vunpack.c.l.b16 %v734
      %v832 = vunpack.c.h.b16 %v734
      %v833 = vunpack.c.l.b16 %v735
      %v834 = vunpack.c.l.b16 %v736
      %v835 = vunpack.c.h.b16 %v736
      %v836 = vunpack.c.l.b16 %v737
      %v837 = vunpack.c.l.b16 %v738
      %v838 = vunpack.c.h.b16 %v738
      %v839 = vunpack.c.l.b16 %v739
      %v840 = vunpack.c.l.b16 %v740
      %v841 = vunpack.c.h.b16 %v740
      %v842 = vunpack.c.l.b16 %v741
      %v843 = vunpack.c.l.b16 %v742
      %v844 = vunpack.c.h.b16 %v742
      %v845 = vunpack.c.l.b16 %v743
      %v846 = vunpack.c.l.b16 %v744
      %v847 = vunpack.c.h.b16 %v744
      %v848 = vunpack.c.l.b16 %v745
      %v849 = vunpack.c.l.b16 %v746
      %v850 = vunpack.c.h.b16 %v746
      %v851 = vunpack.c.l.b16 %v747
      %v852 = vunpack.c.l.b16 %v748
      %v853 = vunpack.c.h.b16 %v748
      %v854 = vunpack.c.l.b16 %v749
      %v855 = vunpack.c.l.b16 %v750
      %v856 = vunpack.c.h.b16 %v750
      %v857 = vunpack.c.l.b16 %v751
      %v858 = vunpack.c.l.b16 %v752
      %v859 = vunpack.c.h.b16 %v752
      %v860 = vunpack.c.l.b16 %v753
      %v861 = vunpack.c.l.b16 %v754
      %v862 = vunpack.c.h.b16 %v754
      %v863 = vunpack.c.l.b16 %v755
      %v864 = vunpack.c.l.b16 %v756
      %v865 = vunpack.c.h.b16 %v756
      %v866 = vunpack.c.l.b16 %v757
      %v867 = vunpack.c.l.b16 %v758
      %v868 = vunpack.c.h.b16 %v758
      %v869 = vunpack.c.l.b16 %v759
      %v870 = vunpack.c.l.b16 %v760
      %v871 = vunpack.c.h.b16 %v760
      %v872 = vunpack.c.l.b16 %v761
      %v873 = vunpack.c.l.b16 %v762
      %v874 = vunpack.c.h.b16 %v762
      %v875 = vunpack.c.l.b16 %v763
      %v876 = vunpack.c.l.b16 %v764
      %v877 = vunpack.c.h.b16 %v764
      %v878 = vunpack.c.l.b16 %v765
      %v879 = vunpack.c.l.b16 %v766
      %v880 = vunpack.c.h.b16 %v766
      %v881 = vunpack.c.l.b16 %v767
      %v882 = vunpack.c.l.b16 %v768
      %v883 = vunpack.c.h.b16 %v768
      %v884 = vunpack.c.l.b16 %v769
      %v885 = vunpack.c.l.b16 %v770
      %v886 = vunpack.c.h.b16 %v770
      %v887 = vunpack.c.l.b16 %v771
      %v888 = vunpack.c.l.b16 %v772
      %v889 = vunpack.c.h.b16 %v772
      %v890 = vunpack.c.l.b16 %v773
      %v891 = vunpack.c.l.b16 %v774
      %v892 = vunpack.c.h.b16 %v774
      %v893 = vunpack.c.l.b16 %v775
      %v894 = vunpack.c.l.b16 %v776
      %v895 = vunpack.c.h.b16 %v776
      %v896 = vunpack.c.l.b16 %v777
      %v897 = vunpack.c.l.b16 %v778
      %v898 = vunpack.c.h.b16 %v778
      %v899 = vunpack.c.l.b16 %v779
      %v900 = vpack.c.b16 %v831, %v828
      %v901 = vpack.c.b16 %v832, %v829
      %v902 = vpack.c.b16 %v833, %v830
      %v903 = vpack.c.b16 %v837, %v834
      %v904 = vpack.c.b16 %v838, %v835
      %v905 = vpack.c.b16 %v839, %v836
      %v906 = vpack.c.b16 %v843, %v840
      %v907 = vpack.c.b16 %v844, %v841
      %v908 = vpack.c.b16 %v845, %v842
      %v909 = vpack.c.b16 %v849, %v846
      %v910 = vpack.c.b16 %v850, %v847
      %v911 = vpack.c.b16 %v851, %v848
      %v912 = vpack.c.b16 %v855, %v852
      %v913 = vpack.c.b16 %v856, %v853
      %v914 = vpack.c.b16 %v857, %v854
      %v915 = vpack.c.b16 %v861, %v858
      %v916 = vpack.c.b16 %v862, %v859
      %v917 = vpack.c.b16 %v863, %v860
      %v918 = vpack.c.b16 %v867, %v864
      %v919 = vpack.c.b16 %v868, %v865
      %v920 = vpack.c.b16 %v869, %v866
      %v921 = vpack.c.b16 %v873, %v870
      %v922 = vpack.c.b16 %v874, %v871
      %v923 = vpack.c.b16 %v875, %v872
      %v924 = vpack.c.b16 %v879, %v876
      %v925 = vpack.c.b16 %v880, %v877
      %v926 = vpack.c.b16 %v881, %v878
      %v927 = vpack.c.b16 %v885, %v882
      %v928 = vpack.c.b16 %v886, %v883
      %v929 = vpack.c.b16 %v887, %v884
      %v930 = vpack.c.b16 %v891, %v888
      %v931 = vpack.c.b16 %v892, %v889
      %v932 = vpack.c.b16 %v893, %v890
      %v933 = vpack.c.b16 %v897, %v894
      %v934 = vpack.c.b16 %v898, %v895
      %v935 = vpack.c.b16 %v899, %v896
      %972 = vmatprep.subr.bf16.mxu0 0
      %973 = vmatpush1.bf16.msra.mxu0 %v708
      %974 = vmatprep.subr.bf16.mxu0 0
      %975 = vmatpush1.bf16.msra.mxu0 %v709
      %976 = vmatprep.subr.bf16.mxu0 0
      %977 = vmatpush1.bf16.msra.mxu0 %v710
      %978 = vmatprep.subr.bf16.mxu0 0
      %979 = vmatpush1.bf16.msra.mxu0 %v711
      %980 = vmatprep.subr.bf16.mxu0 0
      %981 = vmatpush1.bf16.msra.mxu0 %v712
      %982 = vmatprep.subr.bf16.mxu0 0
      %983 = vmatpush1.bf16.msra.mxu0 %v713
      %984 = vmatprep.subr.bf16.mxu0 0
      %985 = vmatpush1.bf16.msra.mxu0 %v714
      %986 = vmatprep.subr.bf16.mxu0 0
      %987 = vmatpush1.bf16.msra.mxu0 %v715
      %988 = vmatprep.subr.bf16.mxu0 0
      %989 = vmatpush1.bf16.msra.mxu0 %v716
      %990 = vmatprep.subr.bf16.mxu0 0
      %991 = vmatpush1.bf16.msra.mxu0 %v717
      %992 = vmatprep.subr.bf16.mxu0 0
      %993 = vmatpush1.bf16.msra.mxu0 %v718
      %994 = vmatprep.subr.bf16.mxu0 0
      %995 = vmatpush1.bf16.msra.mxu0 %v719
      %996 = vmatprep.subr.bf16.mxu0 0
      %997 = vmatpush1.bf16.msra.mxu0 %v720
      %998 = vmatprep.subr.bf16.mxu0 0
      %999 = vmatpush1.bf16.msra.mxu0 %v721
      %1000 = vmatprep.subr.bf16.mxu0 0
      %1001 = vmatpush1.bf16.msra.mxu0 %v722
      %1002 = vmatprep.subr.bf16.mxu0 0
      %1003 = vmatpush1.bf16.msra.mxu0 %v723
      %1004 = vmatprep.mubr.bf16.mxu0 %v901
      %1005 = vmatmul.mubr.bf16.gmra.mrb[0].mxu0 %v900
      %v1006 = vpop.f32.mrb[0].mxu0
      %v1007 = vadd.f32 0.0, %v1006
      %v1008 = vpop.f32.mrb[0].mxu0
      %v1009 = vpop.f32.mrb[0].mxu0
      %v1010 = vadd.f32 0.0, %v1009
      %v1011 = vpop.f32.mrb[0].mxu0
      %1012 = vmatprep.mubr.bf16.mxu0 %v904
      %1013 = vmatmul.mubr.bf16.gmra.mrb[0].mxu0 %v903
      %v1014 = vpop.f32.mrb[0].mxu0
      %v1015 = vadd.f32 0.0, %v1014
      %v1016 = vpop.f32.mrb[0].mxu0
      %v1017 = vpop.f32.mrb[0].mxu0
      %v1018 = vadd.f32 0.0, %v1017
      %v1019 = vpop.f32.mrb[0].mxu0
      %1020 = vmatprep.mubr.bf16.mxu0 %v907
      %1021 = vmatmul.mubr.bf16.gmra.mrb[0].mxu0 %v906
      %v1022 = vpop.f32.mrb[0].mxu0
      %v1023 = vadd.f32 0.0, %v1022
      %v1024 = vpop.f32.mrb[0].mxu0
      %v1025 = vpop.f32.mrb[0].mxu0
      %v1026 = vadd.f32 0.0, %v1025
      %v1027 = vpop.f32.mrb[0].mxu0
      %1028 = vmatprep.mubr.bf16.mxu0 %v910
      %1029 = vmatmul.mubr.bf16.gmra.mrb[0].mxu0 %v909
      %v1030 = vpop.f32.mrb[0].mxu0
      %v1031 = vadd.f32 0.0, %v1030
      %v1032 = vpop.f32.mrb[0].mxu0
      %v1033 = vpop.f32.mrb[0].mxu0
      %v1034 = vadd.f32 0.0, %v1033
      %v1035 = vpop.f32.mrb[0].mxu0
      %1036 = vmatprep.mubr.bf16.mxu0 %v913
      %1037 = vmatmul.mubr.bf16.gmra.mrb[0].mxu0 %v912
      %v1038 = vpop.f32.mrb[0].mxu0
      %v1039 = vadd.f32 0.0, %v1038
      %v1040 = vpop.f32.mrb[0].mxu0
      %v1041 = vpop.f32.mrb[0].mxu0
      %v1042 = vadd.f32 0.0, %v1041
      %v1043 = vpop.f32.mrb[0].mxu0
      %1044 = vmatprep.mubr.bf16.mxu0 %v916
      %1045 = vmatmul.mubr.bf16.gmra.mrb[0].mxu0 %v915
      %v1046 = vpop.f32.mrb[0].mxu0
      %v1047 = vadd.f32 0.0, %v1046
      %v1048 = vpop.f32.mrb[0].mxu0
      %v1049 = vpop.f32.mrb[0].mxu0
      %v1050 = vadd.f32 0.0, %v1049
      %v1051 = vpop.f32.mrb[0].mxu0
      %1052 = vmatprep.mubr.bf16.mxu0 %v919
      %1053 = vmatmul.mubr.bf16.gmra.mrb[0].mxu0 %v918
      %v1054 = vpop.f32.mrb[0].mxu0
      %v1055 = vadd.f32 0.0, %v1054
      %v1056 = vpop.f32.mrb[0].mxu0
      %v1057 = vpop.f32.mrb[0].mxu0
      %v1058 = vadd.f32 0.0, %v1057
      %v1059 = vpop.f32.mrb[0].mxu0
      %1060 = vmatprep.mubr.bf16.mxu0 %v922
      %1061 = vmatmul.mubr.bf16.gmra.mrb[0].mxu0 %v921
      %v1062 = vpop.f32.mrb[0].mxu0
      %v1063 = vadd.f32 0.0, %v1062
      %v1064 = vpop.f32.mrb[0].mxu0
      %v1065 = vpop.f32.mrb[0].mxu0
      %v1066 = vadd.f32 0.0, %v1065
      %v1067 = vpop.f32.mrb[0].mxu0
      %1068 = vmatprep.mubr.bf16.mxu0 %v925
      %1069 = vmatmul.mubr.bf16.gmra.mrb[0].mxu0 %v924
      %v1070 = vpop.f32.mrb[0].mxu0
      %v1071 = vadd.f32 0.0, %v1070
      %v1072 = vpop.f32.mrb[0].mxu0
      %v1073 = vpop.f32.mrb[0].mxu0
      %v1074 = vadd.f32 0.0, %v1073
      %v1075 = vpop.f32.mrb[0].mxu0
      %1076 = vmatprep.mubr.bf16.mxu0 %v928
      %1077 = vmatmul.mubr.bf16.gmra.mrb[0].mxu0 %v927
      %v1078 = vpop.f32.mrb[0].mxu0
      %v1079 = vadd.f32 0.0, %v1078
      %v1080 = vpop.f32.mrb[0].mxu0
      %v1081 = vpop.f32.mrb[0].mxu0
      %v1082 = vadd.f32 0.0, %v1081
      %v1083 = vpop.f32.mrb[0].mxu0
      %1084 = vmatprep.mubr.bf16.mxu0 %v931
      %1085 = vmatmul.mubr.bf16.gmra.mrb[0].mxu0 %v930
      %v1086 = vpop.f32.mrb[0].mxu0
      %v1087 = vadd.f32 0.0, %v1086
      %v1088 = vpop.f32.mrb[0].mxu0
      %v1089 = vpop.f32.mrb[0].mxu0
      %v1090 = vadd.f32 0.0, %v1089
      %v1091 = vpop.f32.mrb[0].mxu0
      %1092 = vmatprep.mubr.bf16.mxu0 %v934
      %1093 = vmatmul.mubr.bf16.gmra.mrb[0].mxu0 %v933
      %v1094 = vpop.f32.mrb[0].mxu0
      %v1095 = vadd.f32 0.0, %v1094
      %v1096 = vpop.f32.mrb[0].mxu0
      %v1097 = vpop.f32.mrb[0].mxu0
      %v1098 = vadd.f32 0.0, %v1097
      %v1099 = vpop.f32.mrb[0].mxu0
      %1100 = vdwg.mxu0
      %1101 = vmatprep.subr.bf16.mxu0 0
      %1102 = vmatpush1.bf16.msra.mxu0 %v724
      %1103 = vmatprep.subr.bf16.mxu0 0
      %1104 = vmatpush1.bf16.msra.mxu0 %v725
      %1105 = vmatprep.subr.bf16.mxu0 0
      %1106 = vmatpush1.bf16.msra.mxu0 %v726
      %1107 = vmatprep.subr.bf16.mxu0 0
      %1108 = vmatpush1.bf16.msra.mxu0 %v727
      %1109 = vmatprep.subr.bf16.mxu0 0
      %1110 = vmatpush1.bf16.msra.mxu0 %v728
      %1111 = vmatprep.subr.bf16.mxu0 0
      %1112 = vmatpush1.bf16.msra.mxu0 %v729
      %1113 = vmatprep.subr.bf16.mxu0 0
      %1114 = vmatpush1.bf16.msra.mxu0 %v730
      %1115 = vmatprep.subr.bf16.mxu0 0
      %1116 = vmatpush1.bf16.msra.mxu0 %v731
      %1117 = vmatprep.subr.bf16.mxu0 0
      %1118 = vmatpush1.bf16.msra.mxu0 0
      %1119 = vmatprep.subr.bf16.mxu0 0
      %1120 = vmatpush1.bf16.msra.mxu0 0
      %1121 = vmatprep.subr.bf16.mxu0 0
      %1122 = vmatpush1.bf16.msra.mxu0 0
      %1123 = vmatprep.subr.bf16.mxu0 0
      %1124 = vmatpush1.bf16.msra.mxu0 0
      %1125 = vmatprep.subr.bf16.mxu0 0
      %1126 = vmatpush1.bf16.msra.mxu0 0
      %1127 = vmatprep.subr.bf16.mxu0 0
      %1128 = vmatpush1.bf16.msra.mxu0 0
      %1129 = vmatprep.subr.bf16.mxu0 0
      %1130 = vmatpush1.bf16.msra.mxu0 0
      %1131 = vmatprep.subr.bf16.mxu0 0
      %1132 = vmatpush1.bf16.msra.mxu0 0
      %1133 = vmatprep.mubr.bf16.mxu0 0
      %1134 = vmatmul.mubr.bf16.gmra.mrb[0].mxu0 %v902
      %v1135 = vpop.f32.mrb[0].mxu0
      %v1136 = vadd.f32 %v1007, %v1135
      %v1137 = vpop.f32.mrb[0].mxu0
      %v1138 = vpop.f32.mrb[0].mxu0
      %v1139 = vadd.f32 %v1010, %v1138
      %v1140 = vpop.f32.mrb[0].mxu0
      %1141 = vmatprep.mubr.bf16.mxu0 0
      %1142 = vmatmul.mubr.bf16.gmra.mrb[0].mxu0 %v905
      %v1143 = vpop.f32.mrb[0].mxu0
      %v1144 = vadd.f32 %v1015, %v1143
      %v1145 = vpop.f32.mrb[0].mxu0
      %v1146 = vpop.f32.mrb[0].mxu0
      %v1147 = vadd.f32 %v1018, %v1146
      %v1148 = vpop.f32.mrb[0].mxu0
      %1149 = vmatprep.mubr.bf16.mxu0 0
      %1150 = vmatmul.mubr.bf16.gmra.mrb[0].mxu0 %v908
      %v1151 = vpop.f32.mrb[0].mxu0
      %v1152 = vadd.f32 %v1023, %v1151
      %v1153 = vpop.f32.mrb[0].mxu0
      %v1154 = vpop.f32.mrb[0].mxu0
      %v1155 = vadd.f32 %v1026, %v1154
      %v1156 = vpop.f32.mrb[0].mxu0
      %1157 = vmatprep.mubr.bf16.mxu0 0
      %1158 = vmatmul.mubr.bf16.gmra.mrb[0].mxu0 %v911
      %v1159 = vpop.f32.mrb[0].mxu0
      %v1160 = vadd.f32 %v1031, %v1159
      %v1161 = vpop.f32.mrb[0].mxu0
      %v1162 = vpop.f32.mrb[0].mxu0
      %v1163 = vadd.f32 %v1034, %v1162
      %v1164 = vpop.f32.mrb[0].mxu0
      %1165 = vmatprep.mubr.bf16.mxu0 0
      %1166 = vmatmul.mubr.bf16.gmra.mrb[0].mxu0 %v914
      %v1167 = vpop.f32.mrb[0].mxu0
      %v1168 = vadd.f32 %v1039, %v1167
      %v1169 = vpop.f32.mrb[0].mxu0
      %v1170 = vpop.f32.mrb[0].mxu0
      %v1171 = vadd.f32 %v1042, %v1170
      %v1172 = vpop.f32.mrb[0].mxu0
      %1173 = vmatprep.mubr.bf16.mxu0 0
      %1174 = vmatmul.mubr.bf16.gmra.mrb[0].mxu0 %v917
      %v1175 = vpop.f32.mrb[0].mxu0
      %v1176 = vadd.f32 %v1047, %v1175
      %v1177 = vpop.f32.mrb[0].mxu0
      %v1178 = vpop.f32.mrb[0].mxu0
      %v1179 = vadd.f32 %v1050, %v1178
      %v1180 = vpop.f32.mrb[0].mxu0
      %1181 = vmatprep.mubr.bf16.mxu0 0
      %1182 = vmatmul.mubr.bf16.gmra.mrb[0].mxu0 %v920
      %v1183 = vpop.f32.mrb[0].mxu0
      %v1184 = vadd.f32 %v1055, %v1183
      %v1185 = vpop.f32.mrb[0].mxu0
      %v1186 = vpop.f32.mrb[0].mxu0
      %v1187 = vadd.f32 %v1058, %v1186
      %v1188 = vpop.f32.mrb[0].mxu0
      %1189 = vmatprep.mubr.bf16.mxu0 0
      %1190 = vmatmul.mubr.bf16.gmra.mrb[0].mxu0 %v923
      %v1191 = vpop.f32.mrb[0].mxu0
      %v1192 = vadd.f32 %v1063, %v1191
      %v1193 = vpop.f32.mrb[0].mxu0
      %v1194 = vpop.f32.mrb[0].mxu0
      %v1195 = vadd.f32 %v1066, %v1194
      %v1196 = vpop.f32.mrb[0].mxu0
      %1197 = vmatprep.mubr.bf16.mxu0 0
      %1198 = vmatmul.mubr.bf16.gmra.mrb[0].mxu0 %v926
      %v1199 = vpop.f32.mrb[0].mxu0
      %v1200 = vadd.f32 %v1071, %v1199
      %v1201 = vpop.f32.mrb[0].mxu0
      %v1202 = vpop.f32.mrb[0].mxu0
      %v1203 = vadd.f32 %v1074, %v1202
      %v1204 = vpop.f32.mrb[0].mxu0
      %1205 = vmatprep.mubr.bf16.mxu0 0
      %1206 = vmatmul.mubr.bf16.gmra.mrb[0].mxu0 %v929
      %v1207 = vpop.f32.mrb[0].mxu0
      %v1208 = vadd.f32 %v1079, %v1207
      %v1209 = vpop.f32.mrb[0].mxu0
      %v1210 = vpop.f32.mrb[0].mxu0
      %v1211 = vadd.f32 %v1082, %v1210
      %v1212 = vpop.f32.mrb[0].mxu0
      %1213 = vmatprep.mubr.bf16.mxu0 0
      %1214 = vmatmul.mubr.bf16.gmra.mrb[0].mxu0 %v932
      %v1215 = vpop.f32.mrb[0].mxu0
      %v1216 = vadd.f32 %v1087, %v1215
      %v1217 = vpop.f32.mrb[0].mxu0
      %v1218 = vpop.f32.mrb[0].mxu0
      %v1219 = vadd.f32 %v1090, %v1218
      %v1220 = vpop.f32.mrb[0].mxu0
      %1221 = vmatprep.mubr.bf16.mxu0 0
      %1222 = vmatmul.mubr.bf16.gmra.mrb[0].mxu0 %v935
      %v1223 = vpop.f32.mrb[0].mxu0
      %v1224 = vadd.f32 %v1095, %v1223
      %v1225 = vpop.f32.mrb[0].mxu0
      %v1226 = vpop.f32.mrb[0].mxu0
      %v1227 = vadd.f32 %v1098, %v1226
      %v1228 = vpop.f32.mrb[0].mxu0
      %1229 = vdwg.mxu0
      %v1230 = vld [vmem:[%s218] sm:$0xff]
      %v1231 = vld [vmem:[%s218 + $0x8] sm:$0xff]
      %v1232 = vld [vmem:[%s218 + $0x10] sm:$0xff]
      %v1233 = vld [vmem:[%s218 + $0x18] sm:$0xff]
      %v1234 = vld [vmem:[%s218 + $0x20] sm:$0xff]
      %v1235 = vld [vmem:[%s218 + $0x28] sm:$0xff]
      %v1236 = vld [vmem:[%s218 + $0x30] sm:$0xff]
      %v1237 = vld [vmem:[%s218 + $0x38] sm:$0xff]
      %v1238 = vld [vmem:[%s218 + $0x40] sm:$0xff]
      %v1239 = vld [vmem:[%s218 + $0x48] sm:$0xff]
      %v1240 = vld [vmem:[%s218 + $0x50] sm:$0xff]
      %v1241 = vld [vmem:[%s218 + $0x58] sm:$0xff]
      %v1242 = vld [vmem:[%s218 + $0x60] sm:$0xff]
      %v1243 = vld [vmem:[%s218 + $0x68] sm:$0xff]
      %v1244 = vld [vmem:[%s218 + $0x70] sm:$0xff]
      %v1245 = vld [vmem:[%s218 + $0x78] sm:$0xff]
      %v1246 = vld [vmem:[%s218 + $0x80] sm:$0xff]
      %v1247 = vld [vmem:[%s218 + $0x88] sm:$0xff]
      %v1248 = vld [vmem:[%s218 + $0x90] sm:$0xff]
      %v1249 = vld [vmem:[%s218 + $0x98] sm:$0xff]
      %v1250 = vld [vmem:[%s218 + $0xa0] sm:$0xff]
      %v1251 = vld [vmem:[%s218 + $0xa8] sm:$0xff]
      %v1252 = vld [vmem:[%s218 + $0xb0] sm:$0xff]
      %v1253 = vld [vmem:[%s218 + $0xb8] sm:$0xff]
      %1255 = vset.pattern.permute.xlu0 0
      %1256 = vperm.xlu0 %1255, %v1230
      %v1257 = vpop.permute.xlu0 %1256
      %1260 = vset.pattern.permute.xlu0 0
      %1261 = vperm.xlu0 %1260, %v1231
      %v1262 = vpop.permute.xlu0 %1261
      %1265 = vset.pattern.permute.xlu0 0
      %1266 = vperm.xlu0 %1265, %v1232
      %v1267 = vpop.permute.xlu0 %1266
      %1270 = vset.pattern.permute.xlu0 0
      %1271 = vperm.xlu0 %1270, %v1233
      %v1272 = vpop.permute.xlu0 %1271
      %1275 = vset.pattern.permute.xlu0 0
      %1276 = vperm.xlu0 %1275, %v1234
      %v1277 = vpop.permute.xlu0 %1276
      %1280 = vset.pattern.permute.xlu0 0
      %1281 = vperm.xlu0 %1280, %v1235
      %v1282 = vpop.permute.xlu0 %1281
      %1285 = vset.pattern.permute.xlu0 0
      %1286 = vperm.xlu0 %1285, %v1236
      %v1287 = vpop.permute.xlu0 %1286
      %1290 = vset.pattern.permute.xlu0 0
      %1291 = vperm.xlu0 %1290, %v1237
      %v1292 = vpop.permute.xlu0 %1291
      %1295 = vset.pattern.permute.xlu0 0
      %1296 = vperm.xlu0 %1295, %v1238
      %v1297 = vpop.permute.xlu0 %1296
      %1300 = vset.pattern.permute.xlu0 0
      %1301 = vperm.xlu0 %1300, %v1239
      %v1302 = vpop.permute.xlu0 %1301
      %1305 = vset.pattern.permute.xlu0 0
      %1306 = vperm.xlu0 %1305, %v1240
      %v1307 = vpop.permute.xlu0 %1306
      %1310 = vset.pattern.permute.xlu0 0
      %1311 = vperm.xlu0 %1310, %v1241
      %v1312 = vpop.permute.xlu0 %1311
      %1315 = vset.pattern.permute.xlu0 0
      %1316 = vperm.xlu0 %1315, %v1242
      %v1317 = vpop.permute.xlu0 %1316
      %1320 = vset.pattern.permute.xlu0 0
      %1321 = vperm.xlu0 %1320, %v1243
      %v1322 = vpop.permute.xlu0 %1321
      %1325 = vset.pattern.permute.xlu0 0
      %1326 = vperm.xlu0 %1325, %v1244
      %v1327 = vpop.permute.xlu0 %1326
      %1330 = vset.pattern.permute.xlu0 0
      %1331 = vperm.xlu0 %1330, %v1245
      %v1332 = vpop.permute.xlu0 %1331
      %1335 = vset.pattern.permute.xlu0 0
      %1336 = vperm.xlu0 %1335, %v1246
      %v1337 = vpop.permute.xlu0 %1336
      %1340 = vset.pattern.permute.xlu0 0
      %1341 = vperm.xlu0 %1340, %v1247
      %v1342 = vpop.permute.xlu0 %1341
      %1345 = vset.pattern.permute.xlu0 0
      %1346 = vperm.xlu0 %1345, %v1248
      %v1347 = vpop.permute.xlu0 %1346
      %1350 = vset.pattern.permute.xlu0 0
      %1351 = vperm.xlu0 %1350, %v1249
      %v1352 = vpop.permute.xlu0 %1351
      %1355 = vset.pattern.permute.xlu0 0
      %1356 = vperm.xlu0 %1355, %v1250
      %v1357 = vpop.permute.xlu0 %1356
      %1360 = vset.pattern.permute.xlu0 0
      %1361 = vperm.xlu0 %1360, %v1251
      %v1362 = vpop.permute.xlu0 %1361
      %1365 = vset.pattern.permute.xlu0 0
      %1366 = vperm.xlu0 %1365, %v1252
      %v1367 = vpop.permute.xlu0 %1366
      %1370 = vset.pattern.permute.xlu0 0
      %1371 = vperm.xlu0 %1370, %v1253
      %v1372 = vpop.permute.xlu0 %1371
      %v1374 = vmul.f32 %v1257, %v1136
      %v1375 = vmul.f32 %v1262, %v1139
      %v1376 = vmul.f32 %v1267, %v1144
      %v1377 = vmul.f32 %v1272, %v1147
      %v1378 = vmul.f32 %v1277, %v1152
      %v1379 = vmul.f32 %v1282, %v1155
      %v1380 = vmul.f32 %v1287, %v1160
      %v1381 = vmul.f32 %v1292, %v1163
      %v1382 = vmul.f32 %v1297, %v1168
      %v1383 = vmul.f32 %v1302, %v1171
      %v1384 = vmul.f32 %v1307, %v1176
      %v1385 = vmul.f32 %v1312, %v1179
      %v1386 = vmul.f32 %v1317, %v1184
      %v1387 = vmul.f32 %v1322, %v1187
      %v1388 = vmul.f32 %v1327, %v1192
      %v1389 = vmul.f32 %v1332, %v1195
      %v1390 = vmul.f32 %v1337, %v1200
      %v1391 = vmul.f32 %v1342, %v1203
      %v1392 = vmul.f32 %v1347, %v1208
      %v1393 = vmul.f32 %v1352, %v1211
      %v1394 = vmul.f32 %v1357, %v1216
      %v1395 = vmul.f32 %v1362, %v1219
      %v1396 = vmul.f32 %v1367, %v1224
      %v1397 = vmul.f32 %v1372, %v1227
      %v1398 = vpack.c.bf16 %v1375, %v1374
      %v1399 = vpack.c.bf16 %v1377, %v1376
      %v1400 = vpack.c.bf16 %v1379, %v1378
      %v1401 = vpack.c.bf16 %v1381, %v1380
      %v1402 = vpack.c.bf16 %v1383, %v1382
      %v1403 = vpack.c.bf16 %v1385, %v1384
      %v1404 = vpack.c.bf16 %v1387, %v1386
      %v1405 = vpack.c.bf16 %v1389, %v1388
      %v1406 = vpack.c.bf16 %v1391, %v1390
      %v1407 = vpack.c.bf16 %v1393, %v1392
      %v1408 = vpack.c.bf16 %v1395, %v1394
      %v1409 = vpack.c.bf16 %v1397, %v1396
      %v1422 = vunpack.c.l.b16 %v1398
      %v1423 = vunpack.c.h.b16 %v1398
      %v1424 = vunpack.c.l.b16 %v1399
      %v1425 = vunpack.c.h.b16 %v1399
      %v1426 = vunpack.c.l.b16 %v1400
      %v1427 = vunpack.c.h.b16 %v1400
      %v1428 = vunpack.c.l.b16 %v1401
      %v1429 = vunpack.c.h.b16 %v1401
      %v1430 = vunpack.c.l.b16 %v1402
      %v1431 = vunpack.c.h.b16 %v1402
      %v1432 = vunpack.c.l.b16 %v1403
      %v1433 = vunpack.c.h.b16 %v1403
      %v1434 = vunpack.c.l.b16 %v1404
      %v1435 = vunpack.c.h.b16 %v1404
      %v1436 = vunpack.c.l.b16 %v1405
      %v1437 = vunpack.c.h.b16 %v1405
      %v1438 = vunpack.c.l.b16 %v1406
      %v1439 = vunpack.c.h.b16 %v1406
      %v1440 = vunpack.c.l.b16 %v1407
      %v1441 = vunpack.c.h.b16 %v1407
      %v1442 = vunpack.c.l.b16 %v1408
      %v1443 = vunpack.c.h.b16 %v1408
      %v1444 = vunpack.c.l.b16 %v1409
      %v1445 = vunpack.c.h.b16 %v1409
      %v1446 = vpack.c.b16 %v1422, %v1422
      %v1447 = vpack.c.b16 %v1423, %v1423
      %v1448 = vpack.c.b16 %v1424, %v1424
      %v1449 = vpack.c.b16 %v1425, %v1425
      %v1450 = vpack.c.b16 %v1426, %v1426
      %v1451 = vpack.c.b16 %v1427, %v1427
      %v1452 = vpack.c.b16 %v1428, %v1428
      %v1453 = vpack.c.b16 %v1429, %v1429
      %v1454 = vpack.c.b16 %v1430, %v1430
      %v1455 = vpack.c.b16 %v1431, %v1431
      %v1456 = vpack.c.b16 %v1432, %v1432
      %v1457 = vpack.c.b16 %v1433, %v1433
      %v1458 = vpack.c.b16 %v1434, %v1434
      %v1459 = vpack.c.b16 %v1435, %v1435
      %v1460 = vpack.c.b16 %v1436, %v1436
      %v1461 = vpack.c.b16 %v1437, %v1437
      %v1462 = vpack.c.b16 %v1438, %v1438
      %v1463 = vpack.c.b16 %v1439, %v1439
      %v1464 = vpack.c.b16 %v1440, %v1440
      %v1465 = vpack.c.b16 %v1441, %v1441
      %v1466 = vpack.c.b16 %v1442, %v1442
      %v1467 = vpack.c.b16 %v1443, %v1443
      %v1468 = vpack.c.b16 %v1444, %v1444
      %v1469 = vpack.c.b16 %v1445, %v1445
      %1494 = vst [vmem:[%s224] sm:$0xf] %v1446
      %1495 = vst [vmem:[%s224 + $0x4] sm:$0xf] %v1447
      %1496 = vst [vmem:[%s224 + $0x8] sm:$0xf] %v1448
      %1497 = vst [vmem:[%s224 + $0xc] sm:$0xf] %v1449
      %1498 = vst [vmem:[%s224 + $0x10] sm:$0xf] %v1450
      %1499 = vst [vmem:[%s224 + $0x14] sm:$0xf] %v1451
      %1500 = vst [vmem:[%s224 + $0x18] sm:$0xf] %v1452
      %1501 = vst [vmem:[%s224 + $0x1c] sm:$0xf] %v1453
      %1502 = vst [vmem:[%s224 + $0x20] sm:$0xf] %v1454
      %1503 = vst [vmem:[%s224 + $0x24] sm:$0xf] %v1455
      %1504 = vst [vmem:[%s224 + $0x28] sm:$0xf] %v1456
      %1505 = vst [vmem:[%s224 + $0x2c] sm:$0xf] %v1457
      %1506 = vst [vmem:[%s224 + $0x30] sm:$0xf] %v1458
      %1507 = vst [vmem:[%s224 + $0x34] sm:$0xf] %v1459
      %1508 = vst [vmem:[%s224 + $0x38] sm:$0xf] %v1460
      %1509 = vst [vmem:[%s224 + $0x3c] sm:$0xf] %v1461
      %1510 = vst [vmem:[%s224 + $0x40] sm:$0xf] %v1462
      %1511 = vst [vmem:[%s224 + $0x44] sm:$0xf] %v1463
      %1512 = vst [vmem:[%s224 + $0x48] sm:$0xf] %v1464
      %1513 = vst [vmem:[%s224 + $0x4c] sm:$0xf] %v1465
      %1514 = vst [vmem:[%s224 + $0x50] sm:$0xf] %v1466
      %1515 = vst [vmem:[%s224 + $0x54] sm:$0xf] %v1467
      %1516 = vst [vmem:[%s224 + $0x58] sm:$0xf] %v1468
      %1517 = vst [vmem:[%s224 + $0x5c] sm:$0xf] %v1469
      %s1518 = smul.u32 24, %s15
      %p1519 = scmp.lt.s32.totalorder %s1518, 47
      %s1520 = scalar_select %p1519, %s1518, 47
      %s1521 = smul.addr %s1520, 4
      %s1522 = scalar_lea.vmem %s4, %s1521
      // Predicated region
      $region37: #{hwnn_layer_forward.2} parent=35 // pred_check
        %p1523 = pneg %p127
      $region38: #{hwnn_layer_forward.2} parent=35 // pred_check_branch
        %1525 = sbr.rel (%p1523) target = $region40
      $region39: #{hwnn_layer_forward.2} parent=35 // pred_region
        %s1526 = smul.u32 24, %s15
      $region40: #{hwnn_layer_forward.2} parent=35 // pred_fallthru
        _
    $region36: #{hwnn_layer_forward.2} parent=5 // pred_fallthru
      _
    %p1527 = scmp.le.s32.totalorder 2, %s10
    // Predicated region
    $region41: #{hwnn_layer_forward.2} parent=5 // pred_check
      %p1528 = pneg %p1527
    $region42: #{hwnn_layer_forward.2} parent=5 // pred_check_branch
      %1530 = sbr.rel (%p1528) target = $region44
    $region43: #{hwnn_layer_forward.2} parent=5 // pred_region
      %s1531 = ssub.s32 %s10, 2
      // Predicated region
      $region45: #{hwnn_layer_forward.2} parent=43 // pred_check
        %p1532 = pneg %p133
      $region46: #{hwnn_layer_forward.2} parent=43 // pred_check_branch
        %1534 = sbr.rel (%p1532) target = $region48
      $region47: #{hwnn_layer_forward.2} parent=43 // pred_region
        %s1535 = smul.u32 24, %s16
        %p1536 = scmp.lt.s32.totalorder %s1535, 47
        %s1537 = scalar_select %p1536, %s1535, 47
        %s1538 = smul.addr %s1537, 4
        %s1539 = scalar_lea.vmem %s4, %s1538
      $region48: #{hwnn_layer_forward.2} parent=43 // pred_fallthru
        _
    $region44: #{hwnn_layer_forward.2} parent=5 // pred_fallthru
      _
  $region6: #{hwnn_layer_forward.2} parent=0 // loop_footer
    %s14 = sadd.s32 1, %s10
  $region7: #{hwnn_layer_forward.2} parent=0 // loop_footer_branch
    %9 = sbr.rel target = $region3
  $region8: #{hwnn_layer_forward.2} parent=0 // loop_exit
    _

</llo_original>
